<compile_context>
chip_gen: v7x
topology: tpu7x:2x2x1
jax: 0.10.0
libtpu: 0.0.40
codegen_flags: <defaults>
</compile_context>

<pallas_src>
import functools

import jax
import jax.numpy as jnp
from jax.experimental import pallas as pl
from jax.experimental.pallas import tpu as pltpu

EPS = 1e-5
_LANES = 128


def _round_up(x, m):
    return (x + m - 1) // m * m


# --------------------------------------------------------------------------- #
# Kernels
# --------------------------------------------------------------------------- #
def _stats1_kernel(x_ref, w1_ref, b1_ref, sum_ref, sumsq_ref,
                   *, tile_t, t_valid, needs_mask):
    """Pass 1: per-batch lane-wide partial sum / sum^2 of h = relu(w1 @ x + b1).

    x_ref   : (small, tile_t)          (bf16 or f32)
    w1_ref  : (big, small)             resident
    b1_ref  : (big, 1) f32             resident
    sum_ref, sumsq_ref : (big, 128) f32 accumulators, resident across the t axis
                         (distinct block per batch index n).
    """
    @pl.when(pl.program_id(1) == 0)
    def _():
        sum_ref[...] = jnp.zeros_like(sum_ref)
        sumsq_ref[...] = jnp.zeros_like(sumsq_ref)

    h = jnp.dot(w1_ref[...], x_ref[...], preferred_element_type=jnp.float32)
    h = jnp.maximum(h + b1_ref[...], 0.0)                       # (big, tile_t) f32

    if needs_mask:                                              # compile-time flag
        t0 = pl.program_id(1) * tile_t
        lane = jax.lax.broadcasted_iota(jnp.int32, (1, tile_t), 1)
        h = jnp.where(t0 + lane < t_valid, h, 0.0)

    # Lane-wide partial accumulation: pure VPU adds, lane-dense stores.
    s = sum_ref[...]
    s2 = sumsq_ref[...]
    for c in range(tile_t // _LANES):
        chunk = h[:, c * _LANES:(c + 1) * _LANES]
        s = s + chunk
        s2 = s2 + chunk * chunk
    sum_ref[...] = s
    sumsq_ref[...] = s2


def _main_kernel(x_ref, w1_ref, b1_ref, w2_ref, zb_ref,
                 z_ref, sum_ref, sumsq_ref,
                 *, tile_t, t_valid, needs_mask):
    """Pass 2: recompute h, z = w2_eff @ h + z_bias (BN1 folded into the weights),
    write z, accumulate per-batch lane-wide partial sum / sum^2 of z.

    z_ref   : (small, tile_t) output tile (bf16 on the bf16 path), lane-dense.
    sum_ref, sumsq_ref : (small, 128) f32 accumulators (per batch index n).
    """
    @pl.when(pl.program_id(1) == 0)
    def _():
        sum_ref[...] = jnp.zeros_like(sum_ref)
        sumsq_ref[...] = jnp.zeros_like(sumsq_ref)

    h = jnp.dot(w1_ref[...], x_ref[...], preferred_element_type=jnp.float32)
    h = jnp.maximum(h + b1_ref[...], 0.0)                       # (big, tile_t) f32

    # BN1 is folded into w2_ref (per-input-column scale) and zb_ref (bias).
    z = jnp.dot(w2_ref[...], h.astype(w2_ref.dtype),
                preferred_element_type=jnp.float32) + zb_ref[...]   # (small, tile_t)
    z_ref[...] = z.astype(z_ref.dtype)

    if needs_mask:
        t0 = pl.program_id(1) * tile_t
        lane = jax.lax.broadcasted_iota(jnp.int32, (1, tile_t), 1)
        z = jnp.where(t0 + lane < t_valid, z, 0.0)

    s = sum_ref[...]
    s2 = sumsq_ref[...]
    for c in range(tile_t // _LANES):
        chunk = z[:, c * _LANES:(c + 1) * _LANES]
        s = s + chunk
        s2 = s2 + chunk * chunk
    sum_ref[...] = s
    sumsq_ref[...] = s2


def _bn2_kernel(z_ref, mean2_ref, rstd2_ref, o_ref):
    """Pass 3: out = (z - mean2) * rstd2, elementwise, fully parallel."""
    o_ref[...] = ((z_ref[...].astype(jnp.float32) - mean2_ref[...])
                  * rstd2_ref[...]).astype(o_ref.dtype)


# --------------------------------------------------------------------------- #
# Wrapper
# --------------------------------------------------------------------------- #
def _vmem_estimate(tile_t, small, big, mm_bytes, z_bytes):
    """Rough VMEM live-set estimate for pass 2 (the largest of the three)."""
    est = 0
    est += 2 * small * tile_t * mm_bytes                 # x tiles (double-buffered)
    est += 2 * small * tile_t * z_bytes                  # z tiles (double-buffered)
    est += 2 * (big * small + small * big) * mm_bytes    # w1, w2_eff (resident)
    est += 2 * (big + small) * 4                         # b1, z_bias
    est += 2 * 2 * (big + small) * _LANES * 4            # partial-stat accumulators
    est += (big + small) * tile_t * 4                    # f32 h / z temporaries
    return est


def _pick_tile_t(T, small, big, mm_bytes, z_bytes, target, vmem_budget):
    """Largest multiple-of-128 tile <= target that fits the VMEM budget."""
    tile = min(_round_up(T, _LANES), _round_up(max(target, _LANES), _LANES))
    while tile > _LANES and 2 * _vmem_estimate(tile, small, big,
                                               mm_bytes, z_bytes) > vmem_budget:
        tile -= _LANES
    return tile


def prefinal_layer(x_nct, w_affine, b_affine, w_conv, *,
                   tile_t=None, tile_t_target=1024, use_bf16_matmul=True,
                   vmem_budget_bytes=48 << 20):
    """x_nct: (N, small, T); w_affine: (big, small); b_affine: (big,);
    w_conv: (small, big, 1) (PyTorch Conv1d weight).  Returns (N, small, T)."""
    N, small, T = x_nct.shape
    big, small_in = w_affine.shape
    assert small_in == small
    assert w_conv.shape == (small, big, 1)

    # Hoisted casts: matmul operands optionally bf16, BN/bias/stat math stays f32.
    mm_dtype = jnp.bfloat16 if use_bf16_matmul else jnp.float32
    z_dtype = jnp.bfloat16 if use_bf16_matmul else jnp.float32   # z HBM round trip
    mm_bytes = jnp.dtype(mm_dtype).itemsize
    z_bytes = jnp.dtype(z_dtype).itemsize

    if tile_t is None:
        tile_t = _pick_tile_t(T, small, big, mm_bytes, z_bytes,
                              tile_t_target, vmem_budget_bytes)
    assert tile_t % _LANES == 0, f"tile_t={tile_t} must be a multiple of 128"

    T_pad = _round_up(T, tile_t)
    needs_mask = T_pad != T
    num_t = T_pad // tile_t
    grid = (N, num_t)

    x_mm = x_nct.astype(mm_dtype)                        # (N, small, T)
    if needs_mask:
        x_mm = jnp.pad(x_mm, ((0, 0), (0, 0), (0, T_pad - T)))

    w1 = w_affine.astype(mm_dtype)                       # (big, small)
    b1 = b_affine.reshape(big, 1).astype(jnp.float32)    # (big, 1)
    w2_f32 = w_conv[:, :, 0].astype(jnp.float32)         # (small, big)

    # BlockSpecs: time axis tiled (lane-dense), channel vectors/weights resident,
    # per-batch lane-wide stat accumulators.
    x_spec = pl.BlockSpec((None, small, tile_t), lambda n, t: (n, 0, t))
    z_spec = pl.BlockSpec((None, small, tile_t), lambda n, t: (n, 0, t))
    w1_spec = pl.BlockSpec((big, small), lambda n, t: (0, 0))
    w2_spec = pl.BlockSpec((small, big), lambda n, t: (0, 0))
    vec_big = pl.BlockSpec((big, 1), lambda n, t: (0, 0))
    vec_small = pl.BlockSpec((small, 1), lambda n, t: (0, 0))
    acc_big = pl.BlockSpec((None, big, _LANES), lambda n, t: (n, 0, 0))
    acc_small = pl.BlockSpec((None, small, _LANES), lambda n, t: (n, 0, 0))

    vmem_limit = int(min(max(2 * _vmem_estimate(tile_t, small, big,
                                                mm_bytes, z_bytes),
                             32 << 20), 60 << 20))       # stay under v7x's 64 MiB
    stat_params = pltpu.CompilerParams(                  # N parallel (v7x 2nd TC),
        dimension_semantics=("parallel", "arbitrary"),   # t carries accumulators
        vmem_limit_bytes=vmem_limit)
    par_params = pltpu.CompilerParams(
        dimension_semantics=("parallel", "parallel"),
        vmem_limit_bytes=vmem_limit)

    count = jnp.float32(N * T)

    # ---- pass 1: BN1 statistics --------------------------------------------
    sum_p, sumsq_p = pl.pallas_call(
        functools.partial(_stats1_kernel, tile_t=tile_t, t_valid=T,
                          needs_mask=needs_mask),
        out_shape=(jax.ShapeDtypeStruct((N, big, _LANES), jnp.float32),
                   jax.ShapeDtypeStruct((N, big, _LANES), jnp.float32)),
        grid=grid,
        in_specs=[x_spec, w1_spec, vec_big],
        out_specs=(acc_big, acc_big),
        compiler_params=stat_params,
    )(x_mm, w1, b1)

    sum_h = jnp.sum(sum_p, axis=(0, 2)).reshape(big, 1)
    sum_h2 = jnp.sum(sumsq_p, axis=(0, 2)).reshape(big, 1)
    mean1 = sum_h / count
    var1 = jnp.maximum(sum_h2 / count - mean1 * mean1, 0.0)   # biased variance
    rstd1 = jax.lax.rsqrt(var1 + EPS)

    # Fold BN1 into the 1x1-conv matmul: z = w2 @ ((h - m1) * r1)
    #                                      = (w2 * r1^T) @ h - w2 @ (m1 * r1)
    w2_eff = (w2_f32 * rstd1[:, 0][None, :]).astype(mm_dtype)  # (small, big)
    z_bias = -(w2_f32 @ (mean1 * rstd1))                       # (small, 1) f32

    # ---- pass 2: BN1-folded 1x1 conv, write z, BN2 statistics ----------------
    z, zsum_p, zsumsq_p = pl.pallas_call(
        functools.partial(_main_kernel, tile_t=tile_t, t_valid=T,
                          needs_mask=needs_mask),
        out_shape=(jax.ShapeDtypeStruct((N, small, T_pad), z_dtype),
                   jax.ShapeDtypeStruct((N, small, _LANES), jnp.float32),
                   jax.ShapeDtypeStruct((N, small, _LANES), jnp.float32)),
        grid=grid,
        in_specs=[x_spec, w1_spec, vec_big, w2_spec, vec_small],
        out_specs=(z_spec, acc_small, acc_small),
        compiler_params=stat_params,
    )(x_mm, w1, b1, w2_eff, z_bias)

    sum_z = jnp.sum(zsum_p, axis=(0, 2)).reshape(small, 1)
    sum_z2 = jnp.sum(zsumsq_p, axis=(0, 2)).reshape(small, 1)
    mean2 = sum_z / count
    var2 = jnp.maximum(sum_z2 / count - mean2 * mean2, 0.0)
    rstd2 = jax.lax.rsqrt(var2 + EPS)

    # ---- pass 3: BN2 normalize (elementwise, fully parallel) -----------------
    out = pl.pallas_call(
        _bn2_kernel,
        out_shape=jax.ShapeDtypeStruct((N, small, T_pad), x_nct.dtype),
        grid=grid,
        in_specs=[z_spec, vec_small, vec_small],
        out_specs=z_spec,
        compiler_params=par_params,
    )(z, mean2, rstd2)

    if needs_mask:
        out = out[:, :, :T]
    return out


# --------------------------------------------------------------------------- #
# Pure-JAX reference (training-mode BN, affine=False)
# --------------------------------------------------------------------------- #
def _reference(x_nct, w_affine, b_affine, w_conv):
    h = jnp.einsum("nct,bc->nbt", x_nct, w_affine) + b_affine[None, :, None]
    h = jnp.maximum(h, 0.0)
    m1 = jnp.mean(h, axis=(0, 2), keepdims=True)
    v1 = jnp.mean((h - m1) ** 2, axis=(0, 2), keepdims=True)
    h = (h - m1) / jnp.sqrt(v1 + EPS)
    z = jnp.einsum("nbt,sb->nst", h, w_conv[:, :, 0])
    m2 = jnp.mean(z, axis=(0, 2), keepdims=True)
    v2 = jnp.mean((z - m2) ** 2, axis=(0, 2), keepdims=True)
    return (z - m2) / jnp.sqrt(v2 + EPS)


if __name__ == "__main__":
    # Small shapes consistent with the module: batch=2, small_dim=32, big_dim=64.
    N, small_dim, big_dim = 2, 32, 64

    key = jax.random.PRNGKey(0)
    kx, kw1, kb1, kw2 = jax.random.split(key, 4)

    bound1 = 1.0 / (small_dim ** 0.5)
    bound2 = 1.0 / (big_dim ** 0.5)
    w_affine = jax.random.uniform(kw1, (big_dim, small_dim), jnp.float32, -bound1, bound1)
    b_affine = jax.random.uniform(kb1, (big_dim,), jnp.float32, -bound1, bound1)
    w_conv = jax.random.uniform(kw2, (small_dim, big_dim, 1), jnp.float32, -bound2, bound2)

    # Case 1: T multiple of 128, multi t-step + multi-n accumulation, f32 path.
    T1 = 384
    x1 = jax.random.normal(kx, (N, small_dim, T1), dtype=jnp.float32)
    run_f32 = jax.jit(lambda a, b, c, d: prefinal_layer(
        a, b, c, d, tile_t=128, use_bf16_matmul=False))
    out_f32 = jax.block_until_ready(run_f32(x1, w_affine, b_affine, w_conv))
    ref1 = _reference(x1, w_affine, b_affine, w_conv)
    assert out_f32.shape == (N, small_dim, T1)
    err1 = float(jnp.max(jnp.abs(out_f32 - ref1)))
    assert err1 < 1e-3, f"f32 kernel mismatch vs reference: {err1}"

    # Case 2: ragged T (exercises pad + stat masking), default tile, f32 path.
    T2 = 200
    x2 = jax.random.normal(jax.random.fold_in(kx, 1), (N, small_dim, T2),
                           dtype=jnp.float32)
    run_ragged = jax.jit(lambda a, b, c, d: prefinal_layer(
        a, b, c, d, use_bf16_matmul=False))
    out_ragged = jax.block_until_ready(run_ragged(x2, w_affine, b_affine, w_conv))
    ref2 = _reference(x2, w_affine, b_affine, w_conv)
    assert out_ragged.shape == (N, small_dim, T2)
    err2 = float(jnp.max(jnp.abs(out_ragged - ref2)))
    assert err2 < 1e-3, f"ragged-T f32 kernel mismatch vs reference: {err2}"

    # Case 3: bf16 matmul + bf16 z round trip (loose correctness check).
    run_bf16 = jax.jit(lambda a, b, c, d: prefinal_layer(
        a, b, c, d, tile_t=128, use_bf16_matmul=True))
    out_bf16 = jax.block_until_ready(run_bf16(x1, w_affine, b_affine, w_conv))
    assert out_bf16.shape == (N, small_dim, T1)
    assert bool(jnp.all(jnp.isfinite(out_bf16)))
    err3 = float(jnp.max(jnp.abs(out_bf16.astype(jnp.float32) - ref1)))
    assert err3 < 0.2, f"bf16 kernel mismatch vs reference: {err3}"

    print("KERNEL_OK")
</pallas_src>

<mosaic_0001>
module attributes {stable_mosaic.version = 11 : i64} {
  func.func @_stats1_kernel(%arg0: i32, %arg1: i32, %arg2: memref<1x32x128xf32, #tpu.memory_space<vmem>>, %arg3: memref<64x32xf32, #tpu.memory_space<vmem>>, %arg4: memref<64x1xf32, #tpu.memory_space<vmem>>, %arg5: memref<1x64x128xf32, #tpu.memory_space<vmem>>, %arg6: memref<1x64x128xf32, #tpu.memory_space<vmem>>) attributes {dimension_semantics = [#tpu.dimension_semantics<parallel>, #tpu.dimension_semantics<arbitrary>], iteration_bounds = array<i64: 2, 3>, scalar_prefetch = 0 : i64, scratch_operands = 0 : i64, tpu.core_type = #tpu.core_type<tc>, window_params = [{transform_indices = @transform_0, window_bounds = array<i64: 1, 32, 128>}, {pipeline_mode = #tpu.pipeline_mode<synchronous>, transform_indices = @transform_1, window_bounds = array<i64: 64, 32>}, {pipeline_mode = #tpu.pipeline_mode<synchronous>, transform_indices = @transform_2, window_bounds = array<i64: 64, 1>}, {transform_indices = @transform_3, window_bounds = array<i64: 1, 64, 128>}, {transform_indices = @transform_4, window_bounds = array<i64: 1, 64, 128>}]} {
    %c0_i32 = arith.constant 0 : i32
    %0 = arith.cmpi eq, %arg1, %c0_i32 : i32
    %1 = arith.extui %0 : i1 to i32
    %c0_i32_0 = arith.constant 0 : i32
    %2 = arith.cmpi ne, %1, %c0_i32_0 : i32
    scf.if %2 {
      %cst_20 = arith.constant 0.000000e+00 : f32
      %25 = vector.broadcast %cst_20 : f32 to vector<64x128xf32>
      %c0_21 = arith.constant 0 : index
      %c0_22 = arith.constant 0 : index
      %c0_23 = arith.constant 0 : index
      %26 = vector.load %arg5[%c0_21, %c0_22, %c0_23] : memref<1x64x128xf32, #tpu.memory_space<vmem>>, vector<1x64x128xf32>
      %27 = vector.shape_cast %26 : vector<1x64x128xf32> to vector<64x128xf32>
      %28 = vector.shape_cast %25 : vector<64x128xf32> to vector<1x64x128xf32>
      tpu.vector_store %arg5[%c0_21, %c0_22, %c0_23], %28 {strides = array<i32>} : memref<1x64x128xf32, #tpu.memory_space<vmem>>, vector<1x64x128xf32>,
      %cst_24 = arith.constant 0.000000e+00 : f32
      %29 = vector.broadcast %cst_24 : f32 to vector<64x128xf32>
      %c0_25 = arith.constant 0 : index
      %c0_26 = arith.constant 0 : index
      %c0_27 = arith.constant 0 : index
      %30 = vector.load %arg6[%c0_25, %c0_26, %c0_27] : memref<1x64x128xf32, #tpu.memory_space<vmem>>, vector<1x64x128xf32>
      %31 = vector.shape_cast %30 : vector<1x64x128xf32> to vector<64x128xf32>
      %32 = vector.shape_cast %29 : vector<64x128xf32> to vector<1x64x128xf32>
      tpu.vector_store %arg6[%c0_25, %c0_26, %c0_27], %32 {strides = array<i32>} : memref<1x64x128xf32, #tpu.memory_space<vmem>>, vector<1x64x128xf32>,
    } else {
    }
    %c0 = arith.constant 0 : index
    %c0_1 = arith.constant 0 : index
    %3 = vector.load %arg3[%c0, %c0_1] : memref<64x32xf32, #tpu.memory_space<vmem>>, vector<64x32xf32>
    %c0_2 = arith.constant 0 : index
    %c0_3 = arith.constant 0 : index
    %c0_4 = arith.constant 0 : index
    %4 = vector.load %arg2[%c0_2, %c0_3, %c0_4] : memref<1x32x128xf32, #tpu.memory_space<vmem>>, vector<1x32x128xf32>
    %5 = vector.shape_cast %4 : vector<1x32x128xf32> to vector<32x128xf32>
    %cst = arith.constant dense<0.000000e+00> : vector<64x128xf32>
    %6 = tpu.matmul %3, %5, %cst {dimension_numbers = #tpu.dot_dimension_numbers<[1], [0], [0], [1], [0, 0, 1, 1], [], []>} : vector<64x32xf32>, vector<32x128xf32>, vector<64x128xf32> -> vector<64x128xf32>
    %c0_5 = arith.constant 0 : index
    %c0_6 = arith.constant 0 : index
    %7 = vector.load %arg4[%c0_5, %c0_6] : memref<64x1xf32, #tpu.memory_space<vmem>>, vector<64x1xf32>
    %8 = vector.broadcast %7 : vector<64x1xf32> to vector<64x128xf32>
    %9 = arith.addf %6, %8 : vector<64x128xf32>
    %cst_7 = arith.constant 0.000000e+00 : f32
    %10 = vector.broadcast %cst_7 : f32 to vector<64x128xf32>
    %11 = arith.maximumf %9, %10 : vector<64x128xf32>
    %c0_8 = arith.constant 0 : index
    %c0_9 = arith.constant 0 : index
    %c0_10 = arith.constant 0 : index
    %12 = vector.load %arg5[%c0_8, %c0_9, %c0_10] : memref<1x64x128xf32, #tpu.memory_space<vmem>>, vector<1x64x128xf32>
    %13 = vector.shape_cast %12 : vector<1x64x128xf32> to vector<64x128xf32>
    %c0_11 = arith.constant 0 : index
    %c0_12 = arith.constant 0 : index
    %c0_13 = arith.constant 0 : index
    %14 = vector.load %arg6[%c0_11, %c0_12, %c0_13] : memref<1x64x128xf32, #tpu.memory_space<vmem>>, vector<1x64x128xf32>
    %15 = vector.shape_cast %14 : vector<1x64x128xf32> to vector<64x128xf32>
    %16 = arith.addf %13, %11 : vector<64x128xf32>
    %17 = arith.mulf %11, %11 : vector<64x128xf32>
    %18 = arith.addf %15, %17 : vector<64x128xf32>
    %c0_14 = arith.constant 0 : index
    %c0_15 = arith.constant 0 : index
    %c0_16 = arith.constant 0 : index
    %19 = vector.load %arg5[%c0_14, %c0_15, %c0_16] : memref<1x64x128xf32, #tpu.memory_space<vmem>>, vector<1x64x128xf32>
    %20 = vector.shape_cast %19 : vector<1x64x128xf32> to vector<64x128xf32>
    %21 = vector.shape_cast %16 : vector<64x128xf32> to vector<1x64x128xf32>
    tpu.vector_store %arg5[%c0_14, %c0_15, %c0_16], %21 {strides = array<i32>} : memref<1x64x128xf32, #tpu.memory_space<vmem>>, vector<1x64x128xf32>,
    %c0_17 = arith.constant 0 : index
    %c0_18 = arith.constant 0 : index
    %c0_19 = arith.constant 0 : index
    %22 = vector.load %arg6[%c0_17, %c0_18, %c0_19] : memref<1x64x128xf32, #tpu.memory_space<vmem>>, vector<1x64x128xf32>
    %23 = vector.shape_cast %22 : vector<1x64x128xf32> to vector<64x128xf32>
    %24 = vector.shape_cast %18 : vector<64x128xf32> to vector<1x64x128xf32>
    tpu.vector_store %arg6[%c0_17, %c0_18, %c0_19], %24 {strides = array<i32>} : memref<1x64x128xf32, #tpu.memory_space<vmem>>, vector<1x64x128xf32>,
    return
  }
  func.func @transform_0(%arg0: i32, %arg1: i32) -> (i32, i32, i32) {
    %c0_i32 = arith.constant 0 : i32
    %c0_i32_0 = arith.constant 0 : i32
    return %arg0, %c0_i32, %arg1 : i32, i32, i32
  }
  func.func @transform_1(%arg0: i32, %arg1: i32) -> (i32, i32) {
    %c0_i32 = arith.constant 0 : i32
    %c0_i32_0 = arith.constant 0 : i32
    %c0_i32_1 = arith.constant 0 : i32
    return %c0_i32, %c0_i32_0 : i32, i32
  }
  func.func @transform_2(%arg0: i32, %arg1: i32) -> (i32, i32) {
    %c0_i32 = arith.constant 0 : i32
    %c0_i32_0 = arith.constant 0 : i32
    %c0_i32_1 = arith.constant 0 : i32
    return %c0_i32, %c0_i32_0 : i32, i32
  }
  func.func @transform_3(%arg0: i32, %arg1: i32) -> (i32, i32, i32) {
    %c0_i32 = arith.constant 0 : i32
    %c0_i32_0 = arith.constant 0 : i32
    %c0_i32_1 = arith.constant 0 : i32
    return %arg0, %c0_i32, %c0_i32_0 : i32, i32, i32
  }
  func.func @transform_4(%arg0: i32, %arg1: i32) -> (i32, i32, i32) {
    %c0_i32 = arith.constant 0 : i32
    %c0_i32_0 = arith.constant 0 : i32
    %c0_i32_1 = arith.constant 0 : i32
    return %arg0, %c0_i32, %c0_i32_0 : i32, i32, i32
  }
}

module attributes {stable_mosaic.version = 11 : i64} {
  func.func @_main_kernel(%arg0: i32, %arg1: i32, %arg2: memref<1x32x128xf32, #tpu.memory_space<vmem>>, %arg3: memref<64x32xf32, #tpu.memory_space<vmem>>, %arg4: memref<64x1xf32, #tpu.memory_space<vmem>>, %arg5: memref<32x64xf32, #tpu.memory_space<vmem>>, %arg6: memref<32x1xf32, #tpu.memory_space<vmem>>, %arg7: memref<1x32x128xf32, #tpu.memory_space<vmem>>, %arg8: memref<1x32x128xf32, #tpu.memory_space<vmem>>, %arg9: memref<1x32x128xf32, #tpu.memory_space<vmem>>) attributes {dimension_semantics = [#tpu.dimension_semantics<parallel>, #tpu.dimension_semantics<arbitrary>], iteration_bounds = array<i64: 2, 3>, scalar_prefetch = 0 : i64, scratch_operands = 0 : i64, tpu.core_type = #tpu.core_type<tc>, window_params = [{transform_indices = @transform_0, window_bounds = array<i64: 1, 32, 128>}, {pipeline_mode = #tpu.pipeline_mode<synchronous>, transform_indices = @transform_1, window_bounds = array<i64: 64, 32>}, {pipeline_mode = #tpu.pipeline_mode<synchronous>, transform_indices = @transform_2, window_bounds = array<i64: 64, 1>}, {pipeline_mode = #tpu.pipeline_mode<synchronous>, transform_indices = @transform_3, window_bounds = array<i64: 32, 64>}, {pipeline_mode = #tpu.pipeline_mode<synchronous>, transform_indices = @transform_4, window_bounds = array<i64: 32, 1>}, {transform_indices = @transform_5, window_bounds = array<i64: 1, 32, 128>}, {transform_indices = @transform_6, window_bounds = array<i64: 1, 32, 128>}, {transform_indices = @transform_7, window_bounds = array<i64: 1, 32, 128>}]} {
    %c0_i32 = arith.constant 0 : i32
    %0 = arith.cmpi eq, %arg1, %c0_i32 : i32
    %1 = arith.extui %0 : i1 to i32
    %c0_i32_0 = arith.constant 0 : i32
    %2 = arith.cmpi ne, %1, %c0_i32_0 : i32
    scf.if %2 {
      %cst_28 = arith.constant 0.000000e+00 : f32
      %33 = vector.broadcast %cst_28 : f32 to vector<32x128xf32>
      %c0_29 = arith.constant 0 : index
      %c0_30 = arith.constant 0 : index
      %c0_31 = arith.constant 0 : index
      %34 = vector.load %arg8[%c0_29, %c0_30, %c0_31] : memref<1x32x128xf32, #tpu.memory_space<vmem>>, vector<1x32x128xf32>
      %35 = vector.shape_cast %34 : vector<1x32x128xf32> to vector<32x128xf32>
      %36 = vector.shape_cast %33 : vector<32x128xf32> to vector<1x32x128xf32>
      tpu.vector_store %arg8[%c0_29, %c0_30, %c0_31], %36 {strides = array<i32>} : memref<1x32x128xf32, #tpu.memory_space<vmem>>, vector<1x32x128xf32>,
      %cst_32 = arith.constant 0.000000e+00 : f32
      %37 = vector.broadcast %cst_32 : f32 to vector<32x128xf32>
      %c0_33 = arith.constant 0 : index
      %c0_34 = arith.constant 0 : index
      %c0_35 = arith.constant 0 : index
      %38 = vector.load %arg9[%c0_33, %c0_34, %c0_35] : memref<1x32x128xf32, #tpu.memory_space<vmem>>, vector<1x32x128xf32>
      %39 = vector.shape_cast %38 : vector<1x32x128xf32> to vector<32x128xf32>
      %40 = vector.shape_cast %37 : vector<32x128xf32> to vector<1x32x128xf32>
      tpu.vector_store %arg9[%c0_33, %c0_34, %c0_35], %40 {strides = array<i32>} : memref<1x32x128xf32, #tpu.memory_space<vmem>>, vector<1x32x128xf32>,
    } else {
    }
    %c0 = arith.constant 0 : index
    %c0_1 = arith.constant 0 : index
    %3 = vector.load %arg3[%c0, %c0_1] : memref<64x32xf32, #tpu.memory_space<vmem>>, vector<64x32xf32>
    %c0_2 = arith.constant 0 : index
    %c0_3 = arith.constant 0 : index
    %c0_4 = arith.constant 0 : index
    %4 = vector.load %arg2[%c0_2, %c0_3, %c0_4] : memref<1x32x128xf32, #tpu.memory_space<vmem>>, vector<1x32x128xf32>
    %5 = vector.shape_cast %4 : vector<1x32x128xf32> to vector<32x128xf32>
    %cst = arith.constant dense<0.000000e+00> : vector<64x128xf32>
    %6 = tpu.matmul %3, %5, %cst {dimension_numbers = #tpu.dot_dimension_numbers<[1], [0], [0], [1], [0, 0, 1, 1], [], []>} : vector<64x32xf32>, vector<32x128xf32>, vector<64x128xf32> -> vector<64x128xf32>
    %c0_5 = arith.constant 0 : index
    %c0_6 = arith.constant 0 : index
    %7 = vector.load %arg4[%c0_5, %c0_6] : memref<64x1xf32, #tpu.memory_space<vmem>>, vector<64x1xf32>
    %8 = vector.broadcast %7 : vector<64x1xf32> to vector<64x128xf32>
    %9 = arith.addf %6, %8 : vector<64x128xf32>
    %cst_7 = arith.constant 0.000000e+00 : f32
    %10 = vector.broadcast %cst_7 : f32 to vector<64x128xf32>
    %11 = arith.maximumf %9, %10 : vector<64x128xf32>
    %c0_8 = arith.constant 0 : index
    %c0_9 = arith.constant 0 : index
    %12 = vector.load %arg5[%c0_8, %c0_9] : memref<32x64xf32, #tpu.memory_space<vmem>>, vector<32x64xf32>
    %cst_10 = arith.constant dense<0.000000e+00> : vector<32x128xf32>
    %13 = tpu.matmul %12, %11, %cst_10 {dimension_numbers = #tpu.dot_dimension_numbers<[1], [0], [0], [1], [0, 0, 1, 1], [], []>} : vector<32x64xf32>, vector<64x128xf32>, vector<32x128xf32> -> vector<32x128xf32>
    %c0_11 = arith.constant 0 : index
    %c0_12 = arith.constant 0 : index
    %14 = vector.load %arg6[%c0_11, %c0_12] : memref<32x1xf32, #tpu.memory_space<vmem>>, vector<32x1xf32>
    %15 = vector.broadcast %14 : vector<32x1xf32> to vector<32x128xf32>
    %16 = arith.addf %13, %15 : vector<32x128xf32>
    %c0_13 = arith.constant 0 : index
    %c0_14 = arith.constant 0 : index
    %c0_15 = arith.constant 0 : index
    %17 = vector.load %arg7[%c0_13, %c0_14, %c0_15] : memref<1x32x128xf32, #tpu.memory_space<vmem>>, vector<1x32x128xf32>
    %18 = vector.shape_cast %17 : vector<1x32x128xf32> to vector<32x128xf32>
    %19 = vector.shape_cast %16 : vector<32x128xf32> to vector<1x32x128xf32>
    tpu.vector_store %arg7[%c0_13, %c0_14, %c0_15], %19 {strides = array<i32>} : memref<1x32x128xf32, #tpu.memory_space<vmem>>, vector<1x32x128xf32>,
    %c0_16 = arith.constant 0 : index
    %c0_17 = arith.constant 0 : index
    %c0_18 = arith.constant 0 : index
    %20 = vector.load %arg8[%c0_16, %c0_17, %c0_18] : memref<1x32x128xf32, #tpu.memory_space<vmem>>, vector<1x32x128xf32>
    %21 = vector.shape_cast %20 : vector<1x32x128xf32> to vector<32x128xf32>
    %c0_19 = arith.constant 0 : index
    %c0_20 = arith.constant 0 : index
    %c0_21 = arith.constant 0 : index
    %22 = vector.load %arg9[%c0_19, %c0_20, %c0_21] : memref<1x32x128xf32, #tpu.memory_space<vmem>>, vector<1x32x128xf32>
    %23 = vector.shape_cast %22 : vector<1x32x128xf32> to vector<32x128xf32>
    %24 = arith.addf %21, %16 : vector<32x128xf32>
    %25 = arith.mulf %16, %16 : vector<32x128xf32>
    %26 = arith.addf %23, %25 : vector<32x128xf32>
    %c0_22 = arith.constant 0 : index
    %c0_23 = arith.constant 0 : index
    %c0_24 = arith.constant 0 : index
    %27 = vector.load %arg8[%c0_22, %c0_23, %c0_24] : memref<1x32x128xf32, #tpu.memory_space<vmem>>, vector<1x32x128xf32>
    %28 = vector.shape_cast %27 : vector<1x32x128xf32> to vector<32x128xf32>
    %29 = vector.shape_cast %24 : vector<32x128xf32> to vector<1x32x128xf32>
    tpu.vector_store %arg8[%c0_22, %c0_23, %c0_24], %29 {strides = array<i32>} : memref<1x32x128xf32, #tpu.memory_space<vmem>>, vector<1x32x128xf32>,
    %c0_25 = arith.constant 0 : index
    %c0_26 = arith.constant 0 : index
    %c0_27 = arith.constant 0 : index
    %30 = vector.load %arg9[%c0_25, %c0_26, %c0_27] : memref<1x32x128xf32, #tpu.memory_space<vmem>>, vector<1x32x128xf32>
    %31 = vector.shape_cast %30 : vector<1x32x128xf32> to vector<32x128xf32>
    %32 = vector.shape_cast %26 : vector<32x128xf32> to vector<1x32x128xf32>
    tpu.vector_store %arg9[%c0_25, %c0_26, %c0_27], %32 {strides = array<i32>} : memref<1x32x128xf32, #tpu.memory_space<vmem>>, vector<1x32x128xf32>,
    return
  }
  func.func @transform_0(%arg0: i32, %arg1: i32) -> (i32, i32, i32) {
    %c0_i32 = arith.constant 0 : i32
    %c0_i32_0 = arith.constant 0 : i32
    return %arg0, %c0_i32, %arg1 : i32, i32, i32
  }
  func.func @transform_1(%arg0: i32, %arg1: i32) -> (i32, i32) {
    %c0_i32 = arith.constant 0 : i32
    %c0_i32_0 = arith.constant 0 : i32
    %c0_i32_1 = arith.constant 0 : i32
    return %c0_i32, %c0_i32_0 : i32, i32
  }
  func.func @transform_2(%arg0: i32, %arg1: i32) -> (i32, i32) {
    %c0_i32 = arith.constant 0 : i32
    %c0_i32_0 = arith.constant 0 : i32
    %c0_i32_1 = arith.constant 0 : i32
    return %c0_i32, %c0_i32_0 : i32, i32
  }
  func.func @transform_3(%arg0: i32, %arg1: i32) -> (i32, i32) {
    %c0_i32 = arith.constant 0 : i32
    %c0_i32_0 = arith.constant 0 : i32
    %c0_i32_1 = arith.constant 0 : i32
    return %c0_i32, %c0_i32_0 : i32, i32
  }
  func.func @transform_4(%arg0: i32, %arg1: i32) -> (i32, i32) {
    %c0_i32 = arith.constant 0 : i32
    %c0_i32_0 = arith.constant 0 : i32
    %c0_i32_1 = arith.constant 0 : i32
    return %c0_i32, %c0_i32_0 : i32, i32
  }
  func.func @transform_5(%arg0: i32, %arg1: i32) -> (i32, i32, i32) {
    %c0_i32 = arith.constant 0 : i32
    %c0_i32_0 = arith.constant 0 : i32
    return %arg0, %c0_i32, %arg1 : i32, i32, i32
  }
  func.func @transform_6(%arg0: i32, %arg1: i32) -> (i32, i32, i32) {
    %c0_i32 = arith.constant 0 : i32
    %c0_i32_0 = arith.constant 0 : i32
    %c0_i32_1 = arith.constant 0 : i32
    return %arg0, %c0_i32, %c0_i32_0 : i32, i32, i32
  }
  func.func @transform_7(%arg0: i32, %arg1: i32) -> (i32, i32, i32) {
    %c0_i32 = arith.constant 0 : i32
    %c0_i32_0 = arith.constant 0 : i32
    %c0_i32_1 = arith.constant 0 : i32
    return %arg0, %c0_i32, %c0_i32_0 : i32, i32, i32
  }
}

module attributes {stable_mosaic.version = 11 : i64} {
  func.func @_bn2_kernel(%arg0: i32, %arg1: i32, %arg2: memref<1x32x128xf32, #tpu.memory_space<vmem>>, %arg3: memref<32x1xf32, #tpu.memory_space<vmem>>, %arg4: memref<32x1xf32, #tpu.memory_space<vmem>>, %arg5: memref<1x32x128xf32, #tpu.memory_space<vmem>>) attributes {dimension_semantics = [#tpu.dimension_semantics<parallel>, #tpu.dimension_semantics<parallel>], iteration_bounds = array<i64: 2, 3>, scalar_prefetch = 0 : i64, scratch_operands = 0 : i64, tpu.core_type = #tpu.core_type<tc>, window_params = [{transform_indices = @transform_0, window_bounds = array<i64: 1, 32, 128>}, {pipeline_mode = #tpu.pipeline_mode<synchronous>, transform_indices = @transform_1, window_bounds = array<i64: 32, 1>}, {pipeline_mode = #tpu.pipeline_mode<synchronous>, transform_indices = @transform_2, window_bounds = array<i64: 32, 1>}, {transform_indices = @transform_3, window_bounds = array<i64: 1, 32, 128>}]} {
    %c0 = arith.constant 0 : index
    %c0_0 = arith.constant 0 : index
    %c0_1 = arith.constant 0 : index
    %0 = vector.load %arg2[%c0, %c0_0, %c0_1] : memref<1x32x128xf32, #tpu.memory_space<vmem>>, vector<1x32x128xf32>
    %1 = vector.shape_cast %0 : vector<1x32x128xf32> to vector<32x128xf32>
    %c0_2 = arith.constant 0 : index
    %c0_3 = arith.constant 0 : index
    %2 = vector.load %arg3[%c0_2, %c0_3] : memref<32x1xf32, #tpu.memory_space<vmem>>, vector<32x1xf32>
    %3 = vector.broadcast %2 : vector<32x1xf32> to vector<32x128xf32>
    %4 = arith.subf %1, %3 : vector<32x128xf32>
    %c0_4 = arith.constant 0 : index
    %c0_5 = arith.constant 0 : index
    %5 = vector.load %arg4[%c0_4, %c0_5] : memref<32x1xf32, #tpu.memory_space<vmem>>, vector<32x1xf32>
    %6 = vector.broadcast %5 : vector<32x1xf32> to vector<32x128xf32>
    %7 = arith.mulf %4, %6 : vector<32x128xf32>
    %c0_6 = arith.constant 0 : index
    %c0_7 = arith.constant 0 : index
    %c0_8 = arith.constant 0 : index
    %8 = vector.load %arg5[%c0_6, %c0_7, %c0_8] : memref<1x32x128xf32, #tpu.memory_space<vmem>>, vector<1x32x128xf32>
    %9 = vector.shape_cast %8 : vector<1x32x128xf32> to vector<32x128xf32>
    %10 = vector.shape_cast %7 : vector<32x128xf32> to vector<1x32x128xf32>
    tpu.vector_store %arg5[%c0_6, %c0_7, %c0_8], %10 {strides = array<i32>} : memref<1x32x128xf32, #tpu.memory_space<vmem>>, vector<1x32x128xf32>,
    return
  }
  func.func @transform_0(%arg0: i32, %arg1: i32) -> (i32, i32, i32) {
    %c0_i32 = arith.constant 0 : i32
    %c0_i32_0 = arith.constant 0 : i32
    return %arg0, %c0_i32, %arg1 : i32, i32, i32
  }
  func.func @transform_1(%arg0: i32, %arg1: i32) -> (i32, i32) {
    %c0_i32 = arith.constant 0 : i32
    %c0_i32_0 = arith.constant 0 : i32
    %c0_i32_1 = arith.constant 0 : i32
    return %c0_i32, %c0_i32_0 : i32, i32
  }
  func.func @transform_2(%arg0: i32, %arg1: i32) -> (i32, i32) {
    %c0_i32 = arith.constant 0 : i32
    %c0_i32_0 = arith.constant 0 : i32
    %c0_i32_1 = arith.constant 0 : i32
    return %c0_i32, %c0_i32_0 : i32, i32
  }
  func.func @transform_3(%arg0: i32, %arg1: i32) -> (i32, i32, i32) {
    %c0_i32 = arith.constant 0 : i32
    %c0_i32_0 = arith.constant 0 : i32
    return %arg0, %c0_i32, %arg1 : i32, i32, i32
  }
}

</mosaic_0001>

<llo_original>
// kernel: _lambda_.3
$region0: #{_lambda_.3}
  #allocation0 [shape = 'u32[]', space=smem, size = 0x4, offset = 0x4, fixed_abs, tag = 'smem constant byte address 0x4 - core index']
  #allocation1 [shape = 'u32[144,128]{1,0:T(1,128)}', space=vmem, size = 0x12000, scoped, tag = 'internal scratch']
  %s0 = inlined_call_operand.hbm [shape: f32[2,32,384], index: 0, kind: input, shape index: {}]
  %s1 = inlined_call_operand.vmem [shape: f32[64,32], index: 1, kind: input, shape index: {}]
  %s2 = inlined_call_operand.vmem [shape: f32[64,1], index: 2, kind: input, shape index: {}]
  %s3 = inlined_call_operand.vmem [shape: f32[2,64,128], index: 3, kind: output, shape index: {0}]
  %s4 = inlined_call_operand.vmem [shape: f32[2,64,128], index: 4, kind: output, shape index: {1}]
  %5 = xla_tuple %s3, %s4
  %s6 = sld [smem:[#allocation0]]
  $region61: #{_lambda_.3} parent=0
    _
  %s8 = ssub.s32 1, %s6
  %s9 = scalar_select 0, %s8, %s6
  $region1: #{_lambda_.3} parent=0
    #allocation2 [shape = 'u8[32768]{0}', space=vmem, size = 0x8000, scoped, tag = 'input window, operand 0']
    #allocation3 [shape = 's32[2]{0}', space=sflag, size = 0x8, scoped, tag = 'scoped memory for _lambda_.3']
    %10 = vsyncpa [#allocation3], 0
    %s11 = scalar_lea.sflag [#allocation3], 1
    %12 = vsyncpa %s11, 0
    loop: start=0, step=1, limit=8
    $region2: #{_lambda_.3} parent=1 // loop_pre_header
      _
    $region3: #{_lambda_.3} parent=1 // loop_header
      %s14 = sphi 0, %s18
      %p15 = scmp.ge.s32.totalorder %s14, 8
      %s21 = sphi 0, %s33
      %s22 = sphi 0, %s29
      %s23 = sphi 0, %s21
      %s24 = sphi 0, %s22
      %s25 = sphi 0, %s23
      %s26 = sphi 0, %s24
      %s38 = sphi 0, %s40
      %s41 = sphi 0, %s38
      %s42 = sphi 0, %s41
      %s58 = sphi 0, %s42
      %s62 = sphi 0, %s62
      %s64 = sphi 0, %s62
      %s65 = sphi 0, %s64
      %s79 = sphi 0, %s65
      %s83 = sphi 0, %s83
      %s85 = sphi 0, %s83
      %s86 = sphi 0, %s85
      %s100 = sphi 0, %s86
      %s106 = sphi 0, %s108
      %s109 = sphi 0, %s106
      %s110 = sphi 0, %s109
      %s126 = sphi 0, %s110
      %s132 = sphi 0, %s134
      %s135 = sphi 0, %s132
      %s136 = sphi 0, %s135
      %s152 = sphi 0, %s136
    $region4: #{_lambda_.3} parent=1 // loop_header_branch
      %17 = sbr.rel (%p15) target = $region8
    $region5: #{_lambda_.3} parent=1 // loop_body
      %s19 = ssub.s32 %s14, 1
      %s20 = ssub.s32 %s14, 2
      %s27 = sadd.s32 1, %s22
      %p28 = scmp.ge.s32.totalorder %s27, 3
      %s29 = scalar_select %p28, 0, %s27
      %s30 = sadd.s32 1, %s21
      %s31 = scalar_select %p28, %s30, %s21
      %p32 = scmp.ge.s32.totalorder %s31, 2
      %s33 = scalar_select %p32, 0, %s31
      %s34 = ssub.s32 %s21, %s33
      %s35 = ssub.s32 %s22, %s29
      %s36 = sor.u32 %s34, %s35
      %p37 = scmp.eq.s32.totalorder %s36, 0
      %s39 = sadd.s32 %s38, 1
      %s40 = scalar_select %p37, %s38, %s39
      %p43 = pneg %p37
      %p44 = scmp.eq.s32.totalorder %s14, 5
      %p45 = por %p43, %p44
      %p46 = scmp.ne.s32.totalorder %s38, %s41
      %p47 = scmp.eq.s32.totalorder %s14, 0
      %p48 = por %p46, %p47
      %p49 = scmp.ne.s32.totalorder %s38, %s41
      %p50 = scmp.eq.s32.totalorder %s19, 5
      %p51 = por %p49, %p50
      %p52 = scmp.ne.s32.totalorder %s41, %s42
      %p53 = scmp.eq.s32.totalorder %s19, 0
      %p54 = por %p52, %p53
      %p55 = scmp.ne.s32.totalorder %s41, %s42
      %p56 = scmp.eq.s32.totalorder %s20, 5
      %p57 = por %p55, %p56
      %p59 = scmp.ne.s32.totalorder %s42, %s58
      %p60 = scmp.eq.s32.totalorder %s20, 0
      %p61 = por %p59, %p60
      %s63 = sadd.s32 %s62, 1
      %p66 = scmp.eq.s32.totalorder %s14, 5
      %p67 = scmp.ne.s32.totalorder %s62, %s64
      %p68 = scmp.eq.s32.totalorder %s14, 0
      %p69 = por %p67, %p68
      %p70 = scmp.ne.s32.totalorder %s62, %s64
      %p71 = scmp.eq.s32.totalorder %s19, 5
      %p72 = por %p70, %p71
      %p73 = scmp.ne.s32.totalorder %s64, %s65
      %p74 = scmp.eq.s32.totalorder %s19, 0
      %p75 = por %p73, %p74
      %p76 = scmp.ne.s32.totalorder %s64, %s65
      %p77 = scmp.eq.s32.totalorder %s20, 5
      %p78 = por %p76, %p77
      %p80 = scmp.ne.s32.totalorder %s65, %s79
      %p81 = scmp.eq.s32.totalorder %s20, 0
      %p82 = por %p80, %p81
      %s84 = sadd.s32 %s83, 1
      %p87 = scmp.eq.s32.totalorder %s14, 5
      %p88 = scmp.ne.s32.totalorder %s83, %s85
      %p89 = scmp.eq.s32.totalorder %s14, 0
      %p90 = por %p88, %p89
      %p91 = scmp.ne.s32.totalorder %s83, %s85
      %p92 = scmp.eq.s32.totalorder %s19, 5
      %p93 = por %p91, %p92
      %p94 = scmp.ne.s32.totalorder %s85, %s86
      %p95 = scmp.eq.s32.totalorder %s19, 0
      %p96 = por %p94, %p95
      %p97 = scmp.ne.s32.totalorder %s85, %s86
      %p98 = scmp.eq.s32.totalorder %s20, 5
      %p99 = por %p97, %p98
      %p101 = scmp.ne.s32.totalorder %s86, %s100
      %p102 = scmp.eq.s32.totalorder %s20, 0
      %p103 = por %p101, %p102
      %s104 = ssub.s32 %s21, %s33
      %p105 = scmp.eq.s32.totalorder %s104, 0
      %s107 = sadd.s32 %s106, 1
      %s108 = scalar_select %p105, %s106, %s107
      %p111 = pneg %p105
      %p112 = scmp.eq.s32.totalorder %s14, 5
      %p113 = por %p111, %p112
      %p114 = scmp.ne.s32.totalorder %s106, %s109
      %p115 = scmp.eq.s32.totalorder %s14, 0
      %p116 = por %p114, %p115
      %p117 = scmp.ne.s32.totalorder %s106, %s109
      %p118 = scmp.eq.s32.totalorder %s19, 5
      %p119 = por %p117, %p118
      %p120 = scmp.ne.s32.totalorder %s109, %s110
      %p121 = scmp.eq.s32.totalorder %s19, 0
      %p122 = por %p120, %p121
      %p123 = scmp.ne.s32.totalorder %s109, %s110
      %p124 = scmp.eq.s32.totalorder %s20, 5
      %p125 = por %p123, %p124
      %p127 = scmp.ne.s32.totalorder %s110, %s126
      %p128 = scmp.eq.s32.totalorder %s20, 0
      %p129 = por %p127, %p128
      %s130 = ssub.s32 %s21, %s33
      %p131 = scmp.eq.s32.totalorder %s130, 0
      %s133 = sadd.s32 %s132, 1
      %s134 = scalar_select %p131, %s132, %s133
      %p137 = pneg %p131
      %p138 = scmp.eq.s32.totalorder %s14, 5
      %p139 = por %p137, %p138
      %p140 = scmp.ne.s32.totalorder %s132, %s135
      %p141 = scmp.eq.s32.totalorder %s14, 0
      %p142 = por %p140, %p141
      %p143 = scmp.ne.s32.totalorder %s132, %s135
      %p144 = scmp.eq.s32.totalorder %s19, 5
      %p145 = por %p143, %p144
      %p146 = scmp.ne.s32.totalorder %s135, %s136
      %p147 = scmp.eq.s32.totalorder %s19, 0
      %p148 = por %p146, %p147
      %p149 = scmp.ne.s32.totalorder %s135, %s136
      %p150 = scmp.eq.s32.totalorder %s20, 5
      %p151 = por %p149, %p150
      %p153 = scmp.ne.s32.totalorder %s136, %s152
      %p154 = scmp.eq.s32.totalorder %s20, 0
      %p155 = por %p153, %p154
      %p156 = scmp.le.s32.totalorder 1, %s14
      %p157 = scmp.lt.s32.totalorder %s14, 7
      %p158 = pnand %p156, %p157
      %p159 = pneg %p158
      // Predicated region
      $region9: #{_lambda_.3} parent=5 // pred_check
        _
      $region10: #{_lambda_.3} parent=5 // pred_check_branch
        %161 = sbr.rel (%p158) target = $region12
      $region11: #{_lambda_.3} parent=5 // pred_region
        %s162 = ssub.s32 %s14, 1
        // Predicated region
        $region13: #{_lambda_.3} parent=11 // pred_check
          %p163 = pneg %p75
        $region14: #{_lambda_.3} parent=11 // pred_check_branch
          %165 = sbr.rel (%p163) target = $region16
        $region15: #{_lambda_.3} parent=11 // pred_region
          _
        $region16: #{_lambda_.3} parent=11 // pred_fallthru
          _
        // Predicated region
        $region17: #{_lambda_.3} parent=11 // pred_check
          %p166 = pneg %p96
        $region18: #{_lambda_.3} parent=11 // pred_check_branch
          %168 = sbr.rel (%p166) target = $region20
        $region19: #{_lambda_.3} parent=11 // pred_region
          _
        $region20: #{_lambda_.3} parent=11 // pred_fallthru
          _
      $region12: #{_lambda_.3} parent=5 // pred_fallthru
        _
      %p169 = scmp.lt.s32.totalorder %s14, 6
      // Predicated region
      $region21: #{_lambda_.3} parent=5 // pred_check
        %p170 = pneg %p169
      $region22: #{_lambda_.3} parent=5 // pred_check_branch
        %172 = sbr.rel (%p170) target = $region24
      $region23: #{_lambda_.3} parent=5 // pred_region
        // Predicated region
        $region25: #{_lambda_.3} parent=23 // pred_check
          %p173 = pneg %p48
        $region26: #{_lambda_.3} parent=23 // pred_check_branch
          %175 = sbr.rel (%p173) target = $region28
        $region27: #{_lambda_.3} parent=23 // pred_region
          %s176 = sand.u32 %s38, 1
          %s177 = scalar_lea.sflag [#allocation3], %s176
          %s178 = sand.u32 %s38, 1
          %s179 = smul.addr %s178, 32
          %s180 = scalar_lea.vmem [#allocation2], %s179
          %s182 = ssub.s32 512, 512
          %183 = vsyncadd %s177, %s182
          %s184 = smul.addr %s21, 12
          %s185 = sadd.s32 %s22, %s184
          %s186 = smul.addr %s185, 128
          %s187 = scalar_lea.hbm %s0, %s186
          %s188 = sshll.u32 %s180, 4
          %s189 = int_to_ptr.vmem [resolvable:$true] %s188
          %194 = dma.hbm_to_vmem [thread:$0]  %s187, 512, %s189, %s177, 384, 128, 8
        $region28: #{_lambda_.3} parent=23 // pred_fallthru
          _
      $region24: #{_lambda_.3} parent=5 // pred_fallthru
        _
      %p195 = scmp.le.s32.totalorder 1, %s14
      %p196 = scmp.lt.s32.totalorder %s14, 7
      %p197 = pnand %p195, %p196
      %p198 = pneg %p197
      // Predicated region
      $region29: #{_lambda_.3} parent=5 // pred_check
        _
      $region30: #{_lambda_.3} parent=5 // pred_check_branch
        %200 = sbr.rel (%p197) target = $region32
      $region31: #{_lambda_.3} parent=5 // pred_region
        %s201 = ssub.s32 %s14, 1
        %s202 = sand.u32 %s41, 1
        %s203 = scalar_lea.sflag [#allocation3], %s202
        %s204 = sand.u32 %s41, 1
        %s205 = smul.addr %s204, 32
        %s206 = scalar_lea.vmem [#allocation2], %s205
        // Predicated region
        $region33: #{_lambda_.3} parent=31 // pred_check
          %p207 = pneg %p54
        $region34: #{_lambda_.3} parent=31 // pred_check_branch
          %209 = sbr.rel (%p207) target = $region36
        $region35: #{_lambda_.3} parent=31 // pred_region
          %210 = dma.done %s203, 512
        $region36: #{_lambda_.3} parent=31 // pred_fallthru
          _
        %s211 = sand.u32 %s41, 1
        %s212 = scalar_lea.sflag [#allocation3], %s211
        %s213 = sand.u32 %s41, 1
        %s214 = smul.addr %s213, 32
        %s215 = scalar_lea.vmem [#allocation2], %s214
        %p216 = pneg %p54
        %p217 = pneg %p51
        %p218 = pneg %p75
        %p219 = pneg %p72
        %p220 = pneg %p96
        %p221 = pneg %p93
        %p222 = pneg %p122
        %p223 = pneg %p119
        %p224 = scmp.lt.s32.totalorder %s23, 1
        %s225 = scalar_select %p224, %s23, 1
        %s226 = smul.addr %s225, 8
        %s227 = smul.addr %s226, 8
        %s228 = scalar_lea.vmem %s3, %s227
        %p229 = pneg %p148
        %p230 = pneg %p145
        %p231 = scmp.lt.s32.totalorder %s23, 1
        %s232 = scalar_select %p231, %s23, 1
        %s233 = smul.addr %s232, 8
        %s234 = smul.addr %s233, 8
        %s235 = scalar_lea.vmem %s4, %s234
        %p236 = scmp.lt.s32.totalorder %s23, 1
        %s237 = scalar_select %p236, %s23, 1
        %s238 = smul.addr %s237, 8
        %s239 = smul.addr %s238, 8
        %s240 = scalar_lea.vmem %s3, %s239
        %p241 = scmp.lt.s32.totalorder %s23, 1
        %s242 = scalar_select %p241, %s23, 1
        %s243 = smul.addr %s242, 8
        %s244 = smul.addr %s243, 8
        %s245 = scalar_lea.vmem %s4, %s244
        %p246 = scmp.eq.s32.totalorder %s24, 0
        // Predicated region
        $region37: #{_lambda_.3} parent=31 // pred_check
          %p247 = pneg %p246
        $region38: #{_lambda_.3} parent=31 // pred_check_branch
          %249 = sbr.rel (%p247) target = $region40
        $region39: #{_lambda_.3} parent=31 // pred_region
          %250 = vst [vmem:[%s240] sm:$0xff] 0.0
          %251 = vst [vmem:[%s240 + $0x8] sm:$0xff] 0.0
          %252 = vst [vmem:[%s240 + $0x10] sm:$0xff] 0.0
          %253 = vst [vmem:[%s240 + $0x18] sm:$0xff] 0.0
          %254 = vst [vmem:[%s240 + $0x20] sm:$0xff] 0.0
          %255 = vst [vmem:[%s240 + $0x28] sm:$0xff] 0.0
          %256 = vst [vmem:[%s240 + $0x30] sm:$0xff] 0.0
          %257 = vst [vmem:[%s240 + $0x38] sm:$0xff] 0.0
          %258 = vst [vmem:[%s245] sm:$0xff] 0.0
          %259 = vst [vmem:[%s245 + $0x8] sm:$0xff] 0.0
          %260 = vst [vmem:[%s245 + $0x10] sm:$0xff] 0.0
          %261 = vst [vmem:[%s245 + $0x18] sm:$0xff] 0.0
          %262 = vst [vmem:[%s245 + $0x20] sm:$0xff] 0.0
          %263 = vst [vmem:[%s245 + $0x28] sm:$0xff] 0.0
          %264 = vst [vmem:[%s245 + $0x30] sm:$0xff] 0.0
          %265 = vst [vmem:[%s245 + $0x38] sm:$0xff] 0.0
        $region40: #{_lambda_.3} parent=31 // pred_fallthru
          _
        %v266 = vld [vmem:[%s1] sm:$0xff]
        %v267 = vld [vmem:[%s1 + $0x8] sm:$0xff]
        %v268 = vld [vmem:[%s1 + $0x10] sm:$0xff]
        %v269 = vld [vmem:[%s1 + $0x18] sm:$0xff]
        %v270 = vld [vmem:[%s1 + $0x20] sm:$0xff]
        %v271 = vld [vmem:[%s1 + $0x28] sm:$0xff]
        %v272 = vld [vmem:[%s1 + $0x30] sm:$0xff]
        %v273 = vld [vmem:[%s1 + $0x38] sm:$0xff]
        %v274 = vld [vmem:[%s206] sm:$0xff]
        %v275 = vld [vmem:[%s206 + $0x8] sm:$0xff]
        %v276 = vld [vmem:[%s206 + $0x10] sm:$0xff]
        %v277 = vld [vmem:[%s206 + $0x18] sm:$0xff]
        %v278 = vld [vmem:[%s2] sm:$0xff]
        %v279 = vld [vmem:[%s2 + $0x8] sm:$0xff]
        %v280 = vld [vmem:[%s2 + $0x10] sm:$0xff]
        %v281 = vld [vmem:[%s2 + $0x18] sm:$0xff]
        %v282 = vld [vmem:[%s2 + $0x20] sm:$0xff]
        %v283 = vld [vmem:[%s2 + $0x28] sm:$0xff]
        %v284 = vld [vmem:[%s2 + $0x30] sm:$0xff]
        %v285 = vld [vmem:[%s2 + $0x38] sm:$0xff]
        %287 = vset.pattern.permute.xlu0 0
        %288 = vperm.xlu0 %287, %v278
        %v289 = vpop.permute.xlu0 %288
        %292 = vset.pattern.permute.xlu0 0
        %293 = vperm.xlu0 %292, %v279
        %v294 = vpop.permute.xlu0 %293
        %297 = vset.pattern.permute.xlu0 0
        %298 = vperm.xlu0 %297, %v280
        %v299 = vpop.permute.xlu0 %298
        %302 = vset.pattern.permute.xlu0 0
        %303 = vperm.xlu0 %302, %v281
        %v304 = vpop.permute.xlu0 %303
        %307 = vset.pattern.permute.xlu0 0
        %308 = vperm.xlu0 %307, %v282
        %v309 = vpop.permute.xlu0 %308
        %312 = vset.pattern.permute.xlu0 0
        %313 = vperm.xlu0 %312, %v283
        %v314 = vpop.permute.xlu0 %313
        %317 = vset.pattern.permute.xlu0 0
        %318 = vperm.xlu0 %317, %v284
        %v319 = vpop.permute.xlu0 %318
        %322 = vset.pattern.permute.xlu0 0
        %323 = vperm.xlu0 %322, %v285
        %v324 = vpop.permute.xlu0 %323
        %vm326 = vcmask 261120
        %v328 = vsel %vm326, %v266, 0
        %v331 = vsel %vm326, %v267, 0
        %v334 = vsel %vm326, %v268, 0
        %v337 = vsel %vm326, %v269, 0
        %v340 = vsel %vm326, %v270, 0
        %v343 = vsel %vm326, %v271, 0
        %v346 = vsel %vm326, %v272, 0
        %v349 = vsel %vm326, %v273, 0
        %351 = vmatprep.subr.mxu0 0.0
        %352 = vmatpush1.msra.mxu0 %v274
        %353 = vmatprep.subr.mxu0 0.0
        %354 = vmatpush1.msra.mxu0 %v275
        %355 = vmatprep.subr.mxu0 0.0
        %356 = vmatpush1.msra.mxu0 %v276
        %357 = vmatprep.subr.mxu0 0.0
        %358 = vmatpush1.msra.mxu0 %v277
        %359 = vmatprep.subr.mxu0 0.0
        %360 = vmatpush1.msra.mxu0 0.0
        %361 = vmatprep.subr.mxu0 0.0
        %362 = vmatpush1.msra.mxu0 0.0
        %363 = vmatprep.subr.mxu0 0.0
        %364 = vmatpush1.msra.mxu0 0.0
        %365 = vmatprep.subr.mxu0 0.0
        %366 = vmatpush1.msra.mxu0 0.0
        %367 = vmatprep.subr.mxu0 0.0
        %368 = vmatpush1.msra.mxu0 0.0
        %369 = vmatprep.subr.mxu0 0.0
        %370 = vmatpush1.msra.mxu0 0.0
        %371 = vmatprep.subr.mxu0 0.0
        %372 = vmatpush1.msra.mxu0 0.0
        %373 = vmatprep.subr.mxu0 0.0
        %374 = vmatpush1.msra.mxu0 0.0
        %375 = vmatprep.subr.mxu0 0.0
        %376 = vmatpush1.msra.mxu0 0.0
        %377 = vmatprep.subr.mxu0 0.0
        %378 = vmatpush1.msra.mxu0 0.0
        %379 = vmatprep.subr.mxu0 0.0
        %380 = vmatpush1.msra.mxu0 0.0
        %381 = vmatprep.subr.mxu0 0.0
        %382 = vmatpush1.msra.mxu0 0.0
        %383 = vmatprep.subr.mxu0 0.0
        %384 = vmatpush1.msra.mxu0 0.0
        %385 = vmatprep.subr.mxu0 0.0
        %386 = vmatpush1.msra.mxu0 0.0
        %387 = vmatprep.subr.mxu0 0.0
        %388 = vmatpush1.msra.mxu0 0.0
        %389 = vmatprep.subr.mxu0 0.0
        %390 = vmatpush1.msra.mxu0 0.0
        %391 = vmatprep.subr.mxu0 0.0
        %392 = vmatpush1.msra.mxu0 0.0
        %393 = vmatprep.subr.mxu0 0.0
        %394 = vmatpush1.msra.mxu0 0.0
        %395 = vmatprep.subr.mxu0 0.0
        %396 = vmatpush1.msra.mxu0 0.0
        %397 = vmatprep.subr.mxu0 0.0
        %398 = vmatpush1.msra.mxu0 0.0
        %399 = vmatprep.subr.mxu0 0.0
        %400 = vmatpush1.msra.mxu0 0.0
        %401 = vmatprep.subr.mxu0 0.0
        %402 = vmatpush1.msra.mxu0 0.0
        %403 = vmatprep.subr.mxu0 0.0
        %404 = vmatpush1.msra.mxu0 0.0
        %405 = vmatprep.subr.mxu0 0.0
        %406 = vmatpush1.msra.mxu0 0.0
        %407 = vmatprep.subr.mxu0 0.0
        %408 = vmatpush1.msra.mxu0 0.0
        %409 = vmatprep.subr.mxu0 0.0
        %410 = vmatpush1.msra.mxu0 0.0
        %411 = vmatprep.subr.mxu0 0.0
        %412 = vmatpush1.msra.mxu0 0.0
        %413 = vmatprep.subr.mxu0 0.0
        %414 = vmatpush1.msra.mxu0 0.0
        %415 = vmatprep.mubr.f32.mxu0 0.0
        %416 = vmatmul.mubr.f32.gmra.mrb[0].mxu0 %v328
        %v417 = vpop.f32.mrb[0].mxu0
        %v418 = vadd.f32 %v289, %v417
        %v419 = vpop.f32.mrb[0].mxu0
        %420 = vmatprep.mubr.f32.mxu0 0.0
        %421 = vmatmul.mubr.f32.gmra.mrb[0].mxu0 %v331
        %v422 = vpop.f32.mrb[0].mxu0
        %v423 = vadd.f32 %v294, %v422
        %v424 = vpop.f32.mrb[0].mxu0
        %425 = vmatprep.mubr.f32.mxu0 0.0
        %426 = vmatmul.mubr.f32.gmra.mrb[0].mxu0 %v334
        %v427 = vpop.f32.mrb[0].mxu0
        %v428 = vadd.f32 %v299, %v427
        %v429 = vpop.f32.mrb[0].mxu0
        %430 = vmatprep.mubr.f32.mxu0 0.0
        %431 = vmatmul.mubr.f32.gmra.mrb[0].mxu0 %v337
        %v432 = vpop.f32.mrb[0].mxu0
        %v433 = vadd.f32 %v304, %v432
        %v434 = vpop.f32.mrb[0].mxu0
        %435 = vmatprep.mubr.f32.mxu0 0.0
        %436 = vmatmul.mubr.f32.gmra.mrb[0].mxu0 %v340
        %v437 = vpop.f32.mrb[0].mxu0
        %v438 = vadd.f32 %v309, %v437
        %v439 = vpop.f32.mrb[0].mxu0
        %440 = vmatprep.mubr.f32.mxu0 0.0
        %441 = vmatmul.mubr.f32.gmra.mrb[0].mxu0 %v343
        %v442 = vpop.f32.mrb[0].mxu0
        %v443 = vadd.f32 %v314, %v442
        %v444 = vpop.f32.mrb[0].mxu0
        %445 = vmatprep.mubr.f32.mxu0 0.0
        %446 = vmatmul.mubr.f32.gmra.mrb[0].mxu0 %v346
        %v447 = vpop.f32.mrb[0].mxu0
        %v448 = vadd.f32 %v319, %v447
        %v449 = vpop.f32.mrb[0].mxu0
        %450 = vmatprep.mubr.f32.mxu0 0.0
        %451 = vmatmul.mubr.f32.gmra.mrb[0].mxu0 %v349
        %v452 = vpop.f32.mrb[0].mxu0
        %v453 = vadd.f32 %v324, %v452
        %v454 = vpop.f32.mrb[0].mxu0
        %455 = vdwg.mxu0
        %v456 = vmax.f32 %v418, 0.0
        %v457 = vmax.f32 %v423, 0.0
        %v458 = vmax.f32 %v428, 0.0
        %v459 = vmax.f32 %v433, 0.0
        %v460 = vmax.f32 %v438, 0.0
        %v461 = vmax.f32 %v443, 0.0
        %v462 = vmax.f32 %v448, 0.0
        %v463 = vmax.f32 %v453, 0.0
        %v464 = vld [vmem:[%s240] sm:$0xff]
        %v465 = vld [vmem:[%s240 + $0x8] sm:$0xff]
        %v466 = vld [vmem:[%s240 + $0x10] sm:$0xff]
        %v467 = vld [vmem:[%s240 + $0x18] sm:$0xff]
        %v468 = vld [vmem:[%s240 + $0x20] sm:$0xff]
        %v469 = vld [vmem:[%s240 + $0x28] sm:$0xff]
        %v470 = vld [vmem:[%s240 + $0x30] sm:$0xff]
        %v471 = vld [vmem:[%s240 + $0x38] sm:$0xff]
        %v472 = vld [vmem:[%s245] sm:$0xff]
        %v473 = vld [vmem:[%s245 + $0x8] sm:$0xff]
        %v474 = vld [vmem:[%s245 + $0x10] sm:$0xff]
        %v475 = vld [vmem:[%s245 + $0x18] sm:$0xff]
        %v476 = vld [vmem:[%s245 + $0x20] sm:$0xff]
        %v477 = vld [vmem:[%s245 + $0x28] sm:$0xff]
        %v478 = vld [vmem:[%s245 + $0x30] sm:$0xff]
        %v479 = vld [vmem:[%s245 + $0x38] sm:$0xff]
        %v480 = vadd.f32 %v464, %v456
        %v481 = vadd.f32 %v465, %v457
        %v482 = vadd.f32 %v466, %v458
        %v483 = vadd.f32 %v467, %v459
        %v484 = vadd.f32 %v468, %v460
        %v485 = vadd.f32 %v469, %v461
        %v486 = vadd.f32 %v470, %v462
        %v487 = vadd.f32 %v471, %v463
        %v488 = vmul.f32 %v456, %v456
        %v489 = vmul.f32 %v457, %v457
        %v490 = vmul.f32 %v458, %v458
        %v491 = vmul.f32 %v459, %v459
        %v492 = vmul.f32 %v460, %v460
        %v493 = vmul.f32 %v461, %v461
        %v494 = vmul.f32 %v462, %v462
        %v495 = vmul.f32 %v463, %v463
        %v496 = vadd.f32 %v472, %v488
        %v497 = vadd.f32 %v473, %v489
        %v498 = vadd.f32 %v474, %v490
        %v499 = vadd.f32 %v475, %v491
        %v500 = vadd.f32 %v476, %v492
        %v501 = vadd.f32 %v477, %v493
        %v502 = vadd.f32 %v478, %v494
        %v503 = vadd.f32 %v479, %v495
        %504 = vst [vmem:[%s240] sm:$0xff] %v480
        %505 = vst [vmem:[%s240 + $0x8] sm:$0xff] %v481
        %506 = vst [vmem:[%s240 + $0x10] sm:$0xff] %v482
        %507 = vst [vmem:[%s240 + $0x18] sm:$0xff] %v483
        %508 = vst [vmem:[%s240 + $0x20] sm:$0xff] %v484
        %509 = vst [vmem:[%s240 + $0x28] sm:$0xff] %v485
        %510 = vst [vmem:[%s240 + $0x30] sm:$0xff] %v486
        %511 = vst [vmem:[%s240 + $0x38] sm:$0xff] %v487
        %512 = vst [vmem:[%s245] sm:$0xff] %v496
        %513 = vst [vmem:[%s245 + $0x8] sm:$0xff] %v497
        %514 = vst [vmem:[%s245 + $0x10] sm:$0xff] %v498
        %515 = vst [vmem:[%s245 + $0x18] sm:$0xff] %v499
        %516 = vst [vmem:[%s245 + $0x20] sm:$0xff] %v500
        %517 = vst [vmem:[%s245 + $0x28] sm:$0xff] %v501
        %518 = vst [vmem:[%s245 + $0x30] sm:$0xff] %v502
        %519 = vst [vmem:[%s245 + $0x38] sm:$0xff] %v503
        %p520 = scmp.lt.s32.totalorder %s23, 1
        %s521 = scalar_select %p520, %s23, 1
        %s522 = smul.addr %s521, 8
        %s523 = smul.addr %s522, 8
        %s524 = scalar_lea.vmem %s3, %s523
        %p525 = scmp.lt.s32.totalorder %s23, 1
        %s526 = scalar_select %p525, %s23, 1
        %s527 = smul.addr %s526, 8
        %s528 = smul.addr %s527, 8
        %s529 = scalar_lea.vmem %s4, %s528
        // Predicated region
        $region41: #{_lambda_.3} parent=31 // pred_check
          %p530 = pneg %p119
        $region42: #{_lambda_.3} parent=31 // pred_check_branch
          %532 = sbr.rel (%p530) target = $region44
        $region43: #{_lambda_.3} parent=31 // pred_region
          _
        $region44: #{_lambda_.3} parent=31 // pred_fallthru
          _
        // Predicated region
        $region45: #{_lambda_.3} parent=31 // pred_check
          %p533 = pneg %p145
        $region46: #{_lambda_.3} parent=31 // pred_check_branch
          %535 = sbr.rel (%p533) target = $region48
        $region47: #{_lambda_.3} parent=31 // pred_region
          _
        $region48: #{_lambda_.3} parent=31 // pred_fallthru
          _
      $region32: #{_lambda_.3} parent=5 // pred_fallthru
        _
      %p536 = scmp.le.s32.totalorder 2, %s14
      // Predicated region
      $region49: #{_lambda_.3} parent=5 // pred_check
        %p537 = pneg %p536
      $region50: #{_lambda_.3} parent=5 // pred_check_branch
        %539 = sbr.rel (%p537) target = $region52
      $region51: #{_lambda_.3} parent=5 // pred_region
        %s540 = ssub.s32 %s14, 2
        // Predicated region
        $region53: #{_lambda_.3} parent=51 // pred_check
          %p541 = pneg %p125
        $region54: #{_lambda_.3} parent=51 // pred_check_branch
          %543 = sbr.rel (%p541) target = $region56
        $region55: #{_lambda_.3} parent=51 // pred_region
          %p544 = scmp.lt.s32.totalorder %s25, 1
          %s545 = scalar_select %p544, %s25, 1
          %s546 = smul.addr %s545, 8
          %s547 = smul.addr %s546, 8
          %s548 = scalar_lea.vmem %s3, %s547
        $region56: #{_lambda_.3} parent=51 // pred_fallthru
          _
        // Predicated region
        $region57: #{_lambda_.3} parent=51 // pred_check
          %p549 = pneg %p151
        $region58: #{_lambda_.3} parent=51 // pred_check_branch
          %551 = sbr.rel (%p549) target = $region60
        $region59: #{_lambda_.3} parent=51 // pred_region
          %p552 = scmp.lt.s32.totalorder %s25, 1
          %s553 = scalar_select %p552, %s25, 1
          %s554 = smul.addr %s553, 8
          %s555 = smul.addr %s554, 8
          %s556 = scalar_lea.vmem %s4, %s555
        $region60: #{_lambda_.3} parent=51 // pred_fallthru
          _
      $region52: #{_lambda_.3} parent=5 // pred_fallthru
        _
    $region6: #{_lambda_.3} parent=1 // loop_footer
      %s18 = sadd.s32 1, %s14
    $region7: #{_lambda_.3} parent=1 // loop_footer_branch
      %13 = sbr.rel target = $region3
    $region8: #{_lambda_.3} parent=1 // loop_exit
      _
    %557 = vsyncpa [#allocation3], 1
    %s558 = scalar_lea.sflag [#allocation3], 1
    %559 = vsyncpa %s558, 1

// kernel: _lambda_.5
$region0: #{_lambda_.5}
  #allocation0 [shape = 'u32[]', space=smem, size = 0x4, offset = 0x4, fixed_abs, tag = 'smem constant byte address 0x4 - core index']
  #allocation1 [shape = 'u32[144,128]{1,0:T(1,128)}', space=vmem, size = 0x12000, scoped, tag = 'internal scratch']
  %s0 = inlined_call_operand.vmem [shape: f32[2,32,384], index: 0, kind: input, shape index: {}]
  %s1 = inlined_call_operand.vmem [shape: f32[32,1], index: 1, kind: input, shape index: {}]
  %s2 = inlined_call_operand.vmem [shape: f32[32,1], index: 2, kind: input, shape index: {}]
  %s3 = inlined_call_operand.hbm [shape: f32[2,32,384], index: 3, kind: output, shape index: {}]
  %s4 = sld [smem:[#allocation0]]
  $region83: #{_lambda_.5} parent=0
    _
  %s6 = ssub.s32 1, %s4
  %s7 = scalar_select 0, %s6, %s4
  $region1: #{_lambda_.5} parent=0
    #allocation2 [shape = 'u8[32768]{0}', space=vmem, size = 0x8000, scoped, tag = 'input window, operand 0']
    #allocation3 [shape = 'u8[32768]{0}', space=vmem, size = 0x8000, scoped, tag = 'output window, operand 0']
    #allocation4 [shape = 's32[2]{0}', space=sflag, size = 0x8, scoped, tag = 'scoped memory for _lambda_.5']
    %8 = vsyncpa [#allocation4], 0
    %s9 = scalar_lea.sflag [#allocation4], 1
    %10 = vsyncpa %s9, 0
    loop: start=0, step=1, limit=8
    $region2: #{_lambda_.5} parent=1 // loop_pre_header
      _
    $region3: #{_lambda_.5} parent=1 // loop_header
      %s12 = sphi 0, %s16
      %p13 = scmp.ge.s32.totalorder %s12, 8
      %s19 = sphi 0, %s31
      %s20 = sphi 0, %s27
      %s21 = sphi 0, %s19
      %s22 = sphi 0, %s20
      %s23 = sphi 0, %s21
      %s24 = sphi 0, %s22
      %s36 = sphi 0, %s38
      %s39 = sphi 0, %s36
      %s40 = sphi 0, %s39
      %s56 = sphi 0, %s40
      %s60 = sphi 0, %s60
      %s62 = sphi 0, %s60
      %s63 = sphi 0, %s62
      %s77 = sphi 0, %s63
      %s81 = sphi 0, %s81
      %s83 = sphi 0, %s81
      %s84 = sphi 0, %s83
      %s98 = sphi 0, %s84
      %s106 = sphi 0, %s108
      %s109 = sphi 0, %s106
      %s110 = sphi 0, %s109
      %s126 = sphi 0, %s110
    $region4: #{_lambda_.5} parent=1 // loop_header_branch
      %15 = sbr.rel (%p13) target = $region8
    $region5: #{_lambda_.5} parent=1 // loop_body
      %s17 = ssub.s32 %s12, 1
      %s18 = ssub.s32 %s12, 2
      %s25 = sadd.s32 1, %s20
      %p26 = scmp.ge.s32.totalorder %s25, 3
      %s27 = scalar_select %p26, 0, %s25
      %s28 = sadd.s32 1, %s19
      %s29 = scalar_select %p26, %s28, %s19
      %p30 = scmp.ge.s32.totalorder %s29, 2
      %s31 = scalar_select %p30, 0, %s29
      %s32 = ssub.s32 %s19, %s31
      %s33 = ssub.s32 %s20, %s27
      %s34 = sor.u32 %s32, %s33
      %p35 = scmp.eq.s32.totalorder %s34, 0
      %s37 = sadd.s32 %s36, 1
      %s38 = scalar_select %p35, %s36, %s37
      %p41 = pneg %p35
      %p42 = scmp.eq.s32.totalorder %s12, 5
      %p43 = por %p41, %p42
      %p44 = scmp.ne.s32.totalorder %s36, %s39
      %p45 = scmp.eq.s32.totalorder %s12, 0
      %p46 = por %p44, %p45
      %p47 = scmp.ne.s32.totalorder %s36, %s39
      %p48 = scmp.eq.s32.totalorder %s17, 5
      %p49 = por %p47, %p48
      %p50 = scmp.ne.s32.totalorder %s39, %s40
      %p51 = scmp.eq.s32.totalorder %s17, 0
      %p52 = por %p50, %p51
      %p53 = scmp.ne.s32.totalorder %s39, %s40
      %p54 = scmp.eq.s32.totalorder %s18, 5
      %p55 = por %p53, %p54
      %p57 = scmp.ne.s32.totalorder %s40, %s56
      %p58 = scmp.eq.s32.totalorder %s18, 0
      %p59 = por %p57, %p58
      %s61 = sadd.s32 %s60, 1
      %p64 = scmp.eq.s32.totalorder %s12, 5
      %p65 = scmp.ne.s32.totalorder %s60, %s62
      %p66 = scmp.eq.s32.totalorder %s12, 0
      %p67 = por %p65, %p66
      %p68 = scmp.ne.s32.totalorder %s60, %s62
      %p69 = scmp.eq.s32.totalorder %s17, 5
      %p70 = por %p68, %p69
      %p71 = scmp.ne.s32.totalorder %s62, %s63
      %p72 = scmp.eq.s32.totalorder %s17, 0
      %p73 = por %p71, %p72
      %p74 = scmp.ne.s32.totalorder %s62, %s63
      %p75 = scmp.eq.s32.totalorder %s18, 5
      %p76 = por %p74, %p75
      %p78 = scmp.ne.s32.totalorder %s63, %s77
      %p79 = scmp.eq.s32.totalorder %s18, 0
      %p80 = por %p78, %p79
      %s82 = sadd.s32 %s81, 1
      %p85 = scmp.eq.s32.totalorder %s12, 5
      %p86 = scmp.ne.s32.totalorder %s81, %s83
      %p87 = scmp.eq.s32.totalorder %s12, 0
      %p88 = por %p86, %p87
      %p89 = scmp.ne.s32.totalorder %s81, %s83
      %p90 = scmp.eq.s32.totalorder %s17, 5
      %p91 = por %p89, %p90
      %p92 = scmp.ne.s32.totalorder %s83, %s84
      %p93 = scmp.eq.s32.totalorder %s17, 0
      %p94 = por %p92, %p93
      %p95 = scmp.ne.s32.totalorder %s83, %s84
      %p96 = scmp.eq.s32.totalorder %s18, 5
      %p97 = por %p95, %p96
      %p99 = scmp.ne.s32.totalorder %s84, %s98
      %p100 = scmp.eq.s32.totalorder %s18, 0
      %p101 = por %p99, %p100
      %s102 = ssub.s32 %s19, %s31
      %s103 = ssub.s32 %s20, %s27
      %s104 = sor.u32 %s102, %s103
      %p105 = scmp.eq.s32.totalorder %s104, 0
      %s107 = sadd.s32 %s106, 1
      %s108 = scalar_select %p105, %s106, %s107
      %p111 = pneg %p105
      %p112 = scmp.eq.s32.totalorder %s12, 5
      %p113 = por %p111, %p112
      %p114 = scmp.ne.s32.totalorder %s106, %s109
      %p115 = scmp.eq.s32.totalorder %s12, 0
      %p116 = por %p114, %p115
      %p117 = scmp.ne.s32.totalorder %s106, %s109
      %p118 = scmp.eq.s32.totalorder %s17, 5
      %p119 = por %p117, %p118
      %p120 = scmp.ne.s32.totalorder %s109, %s110
      %p121 = scmp.eq.s32.totalorder %s17, 0
      %p122 = por %p120, %p121
      %p123 = scmp.ne.s32.totalorder %s109, %s110
      %p124 = scmp.eq.s32.totalorder %s18, 5
      %p125 = por %p123, %p124
      %p127 = scmp.ne.s32.totalorder %s110, %s126
      %p128 = scmp.eq.s32.totalorder %s18, 0
      %p129 = por %p127, %p128
      %p130 = scmp.le.s32.totalorder 1, %s12
      %p131 = scmp.lt.s32.totalorder %s12, 7
      %p132 = pnand %p130, %p131
      %p133 = pneg %p132
      // Predicated region
      $region9: #{_lambda_.5} parent=5 // pred_check
        _
      $region10: #{_lambda_.5} parent=5 // pred_check_branch
        %135 = sbr.rel (%p132) target = $region12
      $region11: #{_lambda_.5} parent=5 // pred_region
        %s136 = ssub.s32 %s12, 1
        // Predicated region
        $region13: #{_lambda_.5} parent=11 // pred_check
          %p137 = pneg %p73
        $region14: #{_lambda_.5} parent=11 // pred_check_branch
          %139 = sbr.rel (%p137) target = $region16
        $region15: #{_lambda_.5} parent=11 // pred_region
          _
        $region16: #{_lambda_.5} parent=11 // pred_fallthru
          _
        // Predicated region
        $region17: #{_lambda_.5} parent=11 // pred_check
          %p140 = pneg %p94
        $region18: #{_lambda_.5} parent=11 // pred_check_branch
          %142 = sbr.rel (%p140) target = $region20
        $region19: #{_lambda_.5} parent=11 // pred_region
          _
        $region20: #{_lambda_.5} parent=11 // pred_fallthru
          _
      $region12: #{_lambda_.5} parent=5 // pred_fallthru
        _
      %p143 = scmp.lt.s32.totalorder %s12, 6
      // Predicated region
      $region21: #{_lambda_.5} parent=5 // pred_check
        %p144 = pneg %p143
      $region22: #{_lambda_.5} parent=5 // pred_check_branch
        %146 = sbr.rel (%p144) target = $region24
      $region23: #{_lambda_.5} parent=5 // pred_region
        // Predicated region
        $region25: #{_lambda_.5} parent=23 // pred_check
          %p147 = pneg %p46
        $region26: #{_lambda_.5} parent=23 // pred_check_branch
          %149 = sbr.rel (%p147) target = $region28
        $region27: #{_lambda_.5} parent=23 // pred_region
          %s150 = sand.u32 %s36, 1
          %s151 = sand.u32 %s36, 1
          %s152 = smul.addr %s151, 32
          %s153 = scalar_lea.vmem [#allocation2], %s152
          %s154 = smul.addr %s19, 12
          %s155 = sadd.s32 %s20, %s154
          %s156 = smul.addr %s155, 8
          %s157 = scalar_lea.vmem %s0, %s156
          // Predicated region
          $region29: #{_lambda_.5} parent=27 // pred_check
            _
          $region30: #{_lambda_.5} parent=27 // pred_check_branch
            %159 = sbr.rel (0) target = $region32
          $region31: #{_lambda_.5} parent=27 // pred_region
            // Predicated region
            $region33: #{_lambda_.5} parent=31 // pred_check
              _
            $region34: #{_lambda_.5} parent=31 // pred_check_branch
              %161 = sbr.rel (0) target = $region36
            $region35: #{_lambda_.5} parent=31 // pred_region
              // Predicated region
              $region48: #{_lambda_.5} parent=35 // pred_check
                _
              $region49: #{_lambda_.5} parent=35 // pred_check_branch
                %182 = sbr.rel (0) target = $region51
              $region50: #{_lambda_.5} parent=35 // pred_region
                loop: start=0, step=1, limit=1
                $region52: #{_lambda_.5} parent=50 // loop_pre_header
                  _
                $region53: #{_lambda_.5} parent=50 // loop_header
                  %s184 = sphi 0, %s188
                  %p185 = scmp.ge.s32.totalorder %s184, 1
                  %s189 = sphi %s157, %s157
                  %s190 = sphi %s153, %s153
                $region54: #{_lambda_.5} parent=50 // loop_header_branch
                  %187 = sbr.rel (%p185) target = $region58
                $region55: #{_lambda_.5} parent=50 // loop_body
                  %v191 = vld [vmem:[%s189] sm:$0xff]
                  %192 = vst [vmem:[%s190] sm:$0xff] %v191
                  %v193 = vld [vmem:[%s189 + $0x18] sm:$0xff]
                  %194 = vst [vmem:[%s190 + $0x8] sm:$0xff] %v193
                  %v195 = vld [vmem:[%s189 + $0x30] sm:$0xff]
                  %196 = vst [vmem:[%s190 + $0x10] sm:$0xff] %v195
                  %v197 = vld [vmem:[%s189 + $0x48] sm:$0xff]
                  %198 = vst [vmem:[%s190 + $0x18] sm:$0xff] %v197
                $region56: #{_lambda_.5} parent=50 // loop_footer
                  %s188 = sadd.s32 1, %s184
                $region57: #{_lambda_.5} parent=50 // loop_footer_branch
                  %183 = sbr.rel target = $region53
                $region58: #{_lambda_.5} parent=50 // loop_exit
                  _
              $region51: #{_lambda_.5} parent=35 // pred_fallthru
                _
              // Predicated region
              $region59: #{_lambda_.5} parent=35 // pred_check
                _
              $region60: #{_lambda_.5} parent=35 // pred_check_branch
                %200 = sbr.rel target = $region62
              $region61: #{_lambda_.5} parent=35 // pred_region
                _
              $region62: #{_lambda_.5} parent=35 // pred_fallthru
                _
            $region36: #{_lambda_.5} parent=31 // pred_fallthru
              _
            // Predicated region
            $region37: #{_lambda_.5} parent=31 // pred_check
              _
            $region38: #{_lambda_.5} parent=31 // pred_check_branch
              %163 = sbr.rel target = $region40
            $region39: #{_lambda_.5} parent=31 // pred_region
              loop: start=0, step=1, limit=1
              $region41: #{_lambda_.5} parent=39 // loop_pre_header
                _
              $region42: #{_lambda_.5} parent=39 // loop_header
                %s166 = sphi 0, %s170
                %p167 = scmp.ge.s32.totalorder %s166, 1
                %s171 = sphi %s157, %s157
                %s172 = sphi %s153, %s153
              $region43: #{_lambda_.5} parent=39 // loop_header_branch
                %169 = sbr.rel (%p167) target = $region47
              $region44: #{_lambda_.5} parent=39 // loop_body
                %v173 = vld [vmem:[%s171] sm:$0xff]
                %174 = vst [vmem:[%s172] sm:$0xff] %v173
                %v175 = vld [vmem:[%s171 + $0x18] sm:$0xff]
                %176 = vst [vmem:[%s172 + $0x8] sm:$0xff] %v175
                %v177 = vld [vmem:[%s171 + $0x30] sm:$0xff]
                %178 = vst [vmem:[%s172 + $0x10] sm:$0xff] %v177
                %v179 = vld [vmem:[%s171 + $0x48] sm:$0xff]
                %180 = vst [vmem:[%s172 + $0x18] sm:$0xff] %v179
              $region45: #{_lambda_.5} parent=39 // loop_footer
                %s170 = sadd.s32 1, %s166
              $region46: #{_lambda_.5} parent=39 // loop_footer_branch
                %165 = sbr.rel target = $region42
              $region47: #{_lambda_.5} parent=39 // loop_exit
                _
            $region40: #{_lambda_.5} parent=31 // pred_fallthru
              _
          $region32: #{_lambda_.5} parent=27 // pred_fallthru
            _
          %201 = vnop
        $region28: #{_lambda_.5} parent=23 // pred_fallthru
          _
      $region24: #{_lambda_.5} parent=5 // pred_fallthru
        _
      %p202 = scmp.le.s32.totalorder 1, %s12
      %p203 = scmp.lt.s32.totalorder %s12, 7
      %p204 = pnand %p202, %p203
      %p205 = pneg %p204
      // Predicated region
      $region63: #{_lambda_.5} parent=5 // pred_check
        _
      $region64: #{_lambda_.5} parent=5 // pred_check_branch
        %207 = sbr.rel (%p204) target = $region66
      $region65: #{_lambda_.5} parent=5 // pred_region
        %s208 = ssub.s32 %s12, 1
        %s209 = sand.u32 %s39, 1
        %s210 = sand.u32 %s39, 1
        %s211 = smul.addr %s210, 32
        %s212 = scalar_lea.vmem [#allocation2], %s211
        // Predicated region
        $region67: #{_lambda_.5} parent=65 // pred_check
          %p213 = pneg %p52
        $region68: #{_lambda_.5} parent=65 // pred_check_branch
          %215 = sbr.rel (%p213) target = $region70
        $region69: #{_lambda_.5} parent=65 // pred_region
          _
        $region70: #{_lambda_.5} parent=65 // pred_fallthru
          _
        %s216 = sand.u32 %s39, 1
        %s217 = sand.u32 %s39, 1
        %s218 = smul.addr %s217, 32
        %s219 = scalar_lea.vmem [#allocation2], %s218
        %p220 = pneg %p52
        %p221 = pneg %p49
        %p222 = pneg %p73
        %p223 = pneg %p70
        %p224 = pneg %p94
        %p225 = pneg %p91
        %p226 = pneg %p122
        %p227 = pneg %p119
        %s228 = sand.u32 %s109, 1
        %s229 = scalar_lea.sflag [#allocation4], %s228
        %s230 = sand.u32 %s109, 1
        %s231 = smul.addr %s230, 32
        %s232 = scalar_lea.vmem [#allocation3], %s231
        %v233 = vld [vmem:[%s212] sm:$0xff]
        %v234 = vld [vmem:[%s212 + $0x8] sm:$0xff]
        %v235 = vld [vmem:[%s212 + $0x10] sm:$0xff]
        %v236 = vld [vmem:[%s212 + $0x18] sm:$0xff]
        %v237 = vld [vmem:[%s1] sm:$0xff]
        %v238 = vld [vmem:[%s1 + $0x8] sm:$0xff]
        %v239 = vld [vmem:[%s1 + $0x10] sm:$0xff]
        %v240 = vld [vmem:[%s1 + $0x18] sm:$0xff]
        %242 = vset.pattern.permute.xlu0 0
        %243 = vperm.xlu0 %242, %v237
        %v244 = vpop.permute.xlu0 %243
        %247 = vset.pattern.permute.xlu0 0
        %248 = vperm.xlu0 %247, %v238
        %v249 = vpop.permute.xlu0 %248
        %252 = vset.pattern.permute.xlu0 0
        %253 = vperm.xlu0 %252, %v239
        %v254 = vpop.permute.xlu0 %253
        %257 = vset.pattern.permute.xlu0 0
        %258 = vperm.xlu0 %257, %v240
        %v259 = vpop.permute.xlu0 %258
        %v261 = vsub.f32 %v233, %v244
        %v262 = vsub.f32 %v234, %v249
        %v263 = vsub.f32 %v235, %v254
        %v264 = vsub.f32 %v236, %v259
        %v265 = vld [vmem:[%s2] sm:$0xff]
        %v266 = vld [vmem:[%s2 + $0x8] sm:$0xff]
        %v267 = vld [vmem:[%s2 + $0x10] sm:$0xff]
        %v268 = vld [vmem:[%s2 + $0x18] sm:$0xff]
        %270 = vset.pattern.permute.xlu0 0
        %271 = vperm.xlu0 %270, %v265
        %v272 = vpop.permute.xlu0 %271
        %275 = vset.pattern.permute.xlu0 0
        %276 = vperm.xlu0 %275, %v266
        %v277 = vpop.permute.xlu0 %276
        %280 = vset.pattern.permute.xlu0 0
        %281 = vperm.xlu0 %280, %v267
        %v282 = vpop.permute.xlu0 %281
        %285 = vset.pattern.permute.xlu0 0
        %286 = vperm.xlu0 %285, %v268
        %v287 = vpop.permute.xlu0 %286
        %v289 = vmul.f32 %v261, %v272
        %v290 = vmul.f32 %v262, %v277
        %v291 = vmul.f32 %v263, %v282
        %v292 = vmul.f32 %v264, %v287
        %293 = vst [vmem:[%s232] sm:$0xff] %v289
        %294 = vst [vmem:[%s232 + $0x8] sm:$0xff] %v290
        %295 = vst [vmem:[%s232 + $0x10] sm:$0xff] %v291
        %296 = vst [vmem:[%s232 + $0x18] sm:$0xff] %v292
        %s297 = sand.u32 %s109, 1
        %s298 = scalar_lea.sflag [#allocation4], %s297
        %s299 = sand.u32 %s109, 1
        %s300 = smul.addr %s299, 32
        %s301 = scalar_lea.vmem [#allocation3], %s300
        // Predicated region
        $region71: #{_lambda_.5} parent=65 // pred_check
          %p302 = pneg %p119
        $region72: #{_lambda_.5} parent=65 // pred_check_branch
          %304 = sbr.rel (%p302) target = $region74
        $region73: #{_lambda_.5} parent=65 // pred_region
          %s306 = ssub.s32 512, 512
          %307 = vsyncadd %s298, %s306
          %s308 = smul.addr %s21, 12
          %s309 = sadd.s32 %s22, %s308
          %s310 = smul.addr %s309, 128
          %s311 = scalar_lea.hbm %s3, %s310
          %s312 = sshll.u32 %s301, 4
          %s313 = int_to_ptr.vmem [resolvable:$true] %s312
          %318 = dma.vmem_to_hbm [thread:$0]  %s313, 512, %s311, %s298, 128, 384, 8
        $region74: #{_lambda_.5} parent=65 // pred_fallthru
          _
      $region66: #{_lambda_.5} parent=5 // pred_fallthru
        _
      %p319 = scmp.le.s32.totalorder 2, %s12
      // Predicated region
      $region75: #{_lambda_.5} parent=5 // pred_check
        %p320 = pneg %p319
      $region76: #{_lambda_.5} parent=5 // pred_check_branch
        %322 = sbr.rel (%p320) target = $region78
      $region77: #{_lambda_.5} parent=5 // pred_region
        %s323 = ssub.s32 %s12, 2
        // Predicated region
        $region79: #{_lambda_.5} parent=77 // pred_check
          %p324 = pneg %p125
        $region80: #{_lambda_.5} parent=77 // pred_check_branch
          %326 = sbr.rel (%p324) target = $region82
        $region81: #{_lambda_.5} parent=77 // pred_region
          %s327 = sand.u32 %s110, 1
          %s328 = scalar_lea.sflag [#allocation4], %s327
          %s329 = sand.u32 %s110, 1
          %s330 = smul.addr %s329, 32
          %s331 = scalar_lea.vmem [#allocation3], %s330
          %332 = dma.done %s328, 512
        $region82: #{_lambda_.5} parent=77 // pred_fallthru
          _
      $region78: #{_lambda_.5} parent=5 // pred_fallthru
        _
    $region6: #{_lambda_.5} parent=1 // loop_footer
      %s16 = sadd.s32 1, %s12
    $region7: #{_lambda_.5} parent=1 // loop_footer_branch
      %11 = sbr.rel target = $region3
    $region8: #{_lambda_.5} parent=1 // loop_exit
      _
    %333 = vsyncpa [#allocation4], 1
    %s334 = scalar_lea.sflag [#allocation4], 1
    %335 = vsyncpa %s334, 1

// kernel: _lambda_.4
$region0: #{_lambda_.4}
  #allocation0 [shape = 'u32[]', space=smem, size = 0x4, offset = 0x4, fixed_abs, tag = 'smem constant byte address 0x4 - core index']
  #allocation1 [shape = 'u32[144,128]{1,0:T(1,128)}', space=vmem, size = 0x12000, scoped, tag = 'internal scratch']
  %s0 = inlined_call_operand.vmem [shape: f32[2,32,384], index: 0, kind: input, shape index: {}]
  %s1 = inlined_call_operand.vmem [shape: f32[64,32], index: 1, kind: input, shape index: {}]
  %s2 = inlined_call_operand.vmem [shape: f32[64,1], index: 2, kind: input, shape index: {}]
  %s3 = inlined_call_operand.vmem [shape: f32[32,64], index: 3, kind: input, shape index: {}]
  %s4 = inlined_call_operand.vmem [shape: f32[32,1], index: 4, kind: input, shape index: {}]
  %s5 = inlined_call_operand.vmem [shape: f32[2,32,384], index: 5, kind: output, shape index: {0}]
  %s6 = inlined_call_operand.vmem [shape: f32[2,32,128], index: 6, kind: output, shape index: {1}]
  %s7 = inlined_call_operand.vmem [shape: f32[2,32,128], index: 7, kind: output, shape index: {2}]
  %8 = xla_tuple %s5, %s6, %s7
  %s9 = sld [smem:[#allocation0]]
  $region145: #{_lambda_.4} parent=0
    _
  %s11 = ssub.s32 1, %s9
  %s12 = scalar_select 0, %s11, %s9
  $region1: #{_lambda_.4} parent=0
    #allocation2 [shape = 'u8[32768]{0}', space=vmem, size = 0x8000, scoped, tag = 'input window, operand 0']
    #allocation3 [shape = 'u8[32768]{0}', space=vmem, size = 0x8000, scoped, tag = 'output window, operand 0']
    loop: start=0, step=1, limit=8
    $region2: #{_lambda_.4} parent=1 // loop_pre_header
      _
    $region3: #{_lambda_.4} parent=1 // loop_header
      %s14 = sphi 0, %s18
      %p15 = scmp.ge.s32.totalorder %s14, 8
      %s21 = sphi 0, %s33
      %s22 = sphi 0, %s29
      %s23 = sphi 0, %s21
      %s24 = sphi 0, %s22
      %s25 = sphi 0, %s23
      %s26 = sphi 0, %s24
      %s38 = sphi 0, %s40
      %s41 = sphi 0, %s38
      %s42 = sphi 0, %s41
      %s58 = sphi 0, %s42
      %s62 = sphi 0, %s62
      %s64 = sphi 0, %s62
      %s65 = sphi 0, %s64
      %s79 = sphi 0, %s65
      %s83 = sphi 0, %s83
      %s85 = sphi 0, %s83
      %s86 = sphi 0, %s85
      %s100 = sphi 0, %s86
      %s104 = sphi 0, %s104
      %s106 = sphi 0, %s104
      %s107 = sphi 0, %s106
      %s121 = sphi 0, %s107
      %s125 = sphi 0, %s125
      %s127 = sphi 0, %s125
      %s128 = sphi 0, %s127
      %s142 = sphi 0, %s128
      %s150 = sphi 0, %s152
      %s153 = sphi 0, %s150
      %s154 = sphi 0, %s153
      %s170 = sphi 0, %s154
      %s176 = sphi 0, %s178
      %s179 = sphi 0, %s176
      %s180 = sphi 0, %s179
      %s196 = sphi 0, %s180
      %s202 = sphi 0, %s204
      %s205 = sphi 0, %s202
      %s206 = sphi 0, %s205
      %s222 = sphi 0, %s206
    $region4: #{_lambda_.4} parent=1 // loop_header_branch
      %17 = sbr.rel (%p15) target = $region8
    $region5: #{_lambda_.4} parent=1 // loop_body
      %s19 = ssub.s32 %s14, 1
      %s20 = ssub.s32 %s14, 2
      %s27 = sadd.s32 1, %s22
      %p28 = scmp.ge.s32.totalorder %s27, 3
      %s29 = scalar_select %p28, 0, %s27
      %s30 = sadd.s32 1, %s21
      %s31 = scalar_select %p28, %s30, %s21
      %p32 = scmp.ge.s32.totalorder %s31, 2
      %s33 = scalar_select %p32, 0, %s31
      %s34 = ssub.s32 %s21, %s33
      %s35 = ssub.s32 %s22, %s29
      %s36 = sor.u32 %s34, %s35
      %p37 = scmp.eq.s32.totalorder %s36, 0
      %s39 = sadd.s32 %s38, 1
      %s40 = scalar_select %p37, %s38, %s39
      %p43 = pneg %p37
      %p44 = scmp.eq.s32.totalorder %s14, 5
      %p45 = por %p43, %p44
      %p46 = scmp.ne.s32.totalorder %s38, %s41
      %p47 = scmp.eq.s32.totalorder %s14, 0
      %p48 = por %p46, %p47
      %p49 = scmp.ne.s32.totalorder %s38, %s41
      %p50 = scmp.eq.s32.totalorder %s19, 5
      %p51 = por %p49, %p50
      %p52 = scmp.ne.s32.totalorder %s41, %s42
      %p53 = scmp.eq.s32.totalorder %s19, 0
      %p54 = por %p52, %p53
      %p55 = scmp.ne.s32.totalorder %s41, %s42
      %p56 = scmp.eq.s32.totalorder %s20, 5
      %p57 = por %p55, %p56
      %p59 = scmp.ne.s32.totalorder %s42, %s58
      %p60 = scmp.eq.s32.totalorder %s20, 0
      %p61 = por %p59, %p60
      %s63 = sadd.s32 %s62, 1
      %p66 = scmp.eq.s32.totalorder %s14, 5
      %p67 = scmp.ne.s32.totalorder %s62, %s64
      %p68 = scmp.eq.s32.totalorder %s14, 0
      %p69 = por %p67, %p68
      %p70 = scmp.ne.s32.totalorder %s62, %s64
      %p71 = scmp.eq.s32.totalorder %s19, 5
      %p72 = por %p70, %p71
      %p73 = scmp.ne.s32.totalorder %s64, %s65
      %p74 = scmp.eq.s32.totalorder %s19, 0
      %p75 = por %p73, %p74
      %p76 = scmp.ne.s32.totalorder %s64, %s65
      %p77 = scmp.eq.s32.totalorder %s20, 5
      %p78 = por %p76, %p77
      %p80 = scmp.ne.s32.totalorder %s65, %s79
      %p81 = scmp.eq.s32.totalorder %s20, 0
      %p82 = por %p80, %p81
      %s84 = sadd.s32 %s83, 1
      %p87 = scmp.eq.s32.totalorder %s14, 5
      %p88 = scmp.ne.s32.totalorder %s83, %s85
      %p89 = scmp.eq.s32.totalorder %s14, 0
      %p90 = por %p88, %p89
      %p91 = scmp.ne.s32.totalorder %s83, %s85
      %p92 = scmp.eq.s32.totalorder %s19, 5
      %p93 = por %p91, %p92
      %p94 = scmp.ne.s32.totalorder %s85, %s86
      %p95 = scmp.eq.s32.totalorder %s19, 0
      %p96 = por %p94, %p95
      %p97 = scmp.ne.s32.totalorder %s85, %s86
      %p98 = scmp.eq.s32.totalorder %s20, 5
      %p99 = por %p97, %p98
      %p101 = scmp.ne.s32.totalorder %s86, %s100
      %p102 = scmp.eq.s32.totalorder %s20, 0
      %p103 = por %p101, %p102
      %s105 = sadd.s32 %s104, 1
      %p108 = scmp.eq.s32.totalorder %s14, 5
      %p109 = scmp.ne.s32.totalorder %s104, %s106
      %p110 = scmp.eq.s32.totalorder %s14, 0
      %p111 = por %p109, %p110
      %p112 = scmp.ne.s32.totalorder %s104, %s106
      %p113 = scmp.eq.s32.totalorder %s19, 5
      %p114 = por %p112, %p113
      %p115 = scmp.ne.s32.totalorder %s106, %s107
      %p116 = scmp.eq.s32.totalorder %s19, 0
      %p117 = por %p115, %p116
      %p118 = scmp.ne.s32.totalorder %s106, %s107
      %p119 = scmp.eq.s32.totalorder %s20, 5
      %p120 = por %p118, %p119
      %p122 = scmp.ne.s32.totalorder %s107, %s121
      %p123 = scmp.eq.s32.totalorder %s20, 0
      %p124 = por %p122, %p123
      %s126 = sadd.s32 %s125, 1
      %p129 = scmp.eq.s32.totalorder %s14, 5
      %p130 = scmp.ne.s32.totalorder %s125, %s127
      %p131 = scmp.eq.s32.totalorder %s14, 0
      %p132 = por %p130, %p131
      %p133 = scmp.ne.s32.totalorder %s125, %s127
      %p134 = scmp.eq.s32.totalorder %s19, 5
      %p135 = por %p133, %p134
      %p136 = scmp.ne.s32.totalorder %s127, %s128
      %p137 = scmp.eq.s32.totalorder %s19, 0
      %p138 = por %p136, %p137
      %p139 = scmp.ne.s32.totalorder %s127, %s128
      %p140 = scmp.eq.s32.totalorder %s20, 5
      %p141 = por %p139, %p140
      %p143 = scmp.ne.s32.totalorder %s128, %s142
      %p144 = scmp.eq.s32.totalorder %s20, 0
      %p145 = por %p143, %p144
      %s146 = ssub.s32 %s21, %s33
      %s147 = ssub.s32 %s22, %s29
      %s148 = sor.u32 %s146, %s147
      %p149 = scmp.eq.s32.totalorder %s148, 0
      %s151 = sadd.s32 %s150, 1
      %s152 = scalar_select %p149, %s150, %s151
      %p155 = pneg %p149
      %p156 = scmp.eq.s32.totalorder %s14, 5
      %p157 = por %p155, %p156
      %p158 = scmp.ne.s32.totalorder %s150, %s153
      %p159 = scmp.eq.s32.totalorder %s14, 0
      %p160 = por %p158, %p159
      %p161 = scmp.ne.s32.totalorder %s150, %s153
      %p162 = scmp.eq.s32.totalorder %s19, 5
      %p163 = por %p161, %p162
      %p164 = scmp.ne.s32.totalorder %s153, %s154
      %p165 = scmp.eq.s32.totalorder %s19, 0
      %p166 = por %p164, %p165
      %p167 = scmp.ne.s32.totalorder %s153, %s154
      %p168 = scmp.eq.s32.totalorder %s20, 5
      %p169 = por %p167, %p168
      %p171 = scmp.ne.s32.totalorder %s154, %s170
      %p172 = scmp.eq.s32.totalorder %s20, 0
      %p173 = por %p171, %p172
      %s174 = ssub.s32 %s21, %s33
      %p175 = scmp.eq.s32.totalorder %s174, 0
      %s177 = sadd.s32 %s176, 1
      %s178 = scalar_select %p175, %s176, %s177
      %p181 = pneg %p175
      %p182 = scmp.eq.s32.totalorder %s14, 5
      %p183 = por %p181, %p182
      %p184 = scmp.ne.s32.totalorder %s176, %s179
      %p185 = scmp.eq.s32.totalorder %s14, 0
      %p186 = por %p184, %p185
      %p187 = scmp.ne.s32.totalorder %s176, %s179
      %p188 = scmp.eq.s32.totalorder %s19, 5
      %p189 = por %p187, %p188
      %p190 = scmp.ne.s32.totalorder %s179, %s180
      %p191 = scmp.eq.s32.totalorder %s19, 0
      %p192 = por %p190, %p191
      %p193 = scmp.ne.s32.totalorder %s179, %s180
      %p194 = scmp.eq.s32.totalorder %s20, 5
      %p195 = por %p193, %p194
      %p197 = scmp.ne.s32.totalorder %s180, %s196
      %p198 = scmp.eq.s32.totalorder %s20, 0
      %p199 = por %p197, %p198
      %s200 = ssub.s32 %s21, %s33
      %p201 = scmp.eq.s32.totalorder %s200, 0
      %s203 = sadd.s32 %s202, 1
      %s204 = scalar_select %p201, %s202, %s203
      %p207 = pneg %p201
      %p208 = scmp.eq.s32.totalorder %s14, 5
      %p209 = por %p207, %p208
      %p210 = scmp.ne.s32.totalorder %s202, %s205
      %p211 = scmp.eq.s32.totalorder %s14, 0
      %p212 = por %p210, %p211
      %p213 = scmp.ne.s32.totalorder %s202, %s205
      %p214 = scmp.eq.s32.totalorder %s19, 5
      %p215 = por %p213, %p214
      %p216 = scmp.ne.s32.totalorder %s205, %s206
      %p217 = scmp.eq.s32.totalorder %s19, 0
      %p218 = por %p216, %p217
      %p219 = scmp.ne.s32.totalorder %s205, %s206
      %p220 = scmp.eq.s32.totalorder %s20, 5
      %p221 = por %p219, %p220
      %p223 = scmp.ne.s32.totalorder %s206, %s222
      %p224 = scmp.eq.s32.totalorder %s20, 0
      %p225 = por %p223, %p224
      %p226 = scmp.le.s32.totalorder 1, %s14
      %p227 = scmp.lt.s32.totalorder %s14, 7
      %p228 = pnand %p226, %p227
      %p229 = pneg %p228
      // Predicated region
      $region9: #{_lambda_.4} parent=5 // pred_check
        _
      $region10: #{_lambda_.4} parent=5 // pred_check_branch
        %231 = sbr.rel (%p228) target = $region12
      $region11: #{_lambda_.4} parent=5 // pred_region
        %s232 = ssub.s32 %s14, 1
        // Predicated region
        $region13: #{_lambda_.4} parent=11 // pred_check
          %p233 = pneg %p75
        $region14: #{_lambda_.4} parent=11 // pred_check_branch
          %235 = sbr.rel (%p233) target = $region16
        $region15: #{_lambda_.4} parent=11 // pred_region
          _
        $region16: #{_lambda_.4} parent=11 // pred_fallthru
          _
        // Predicated region
        $region17: #{_lambda_.4} parent=11 // pred_check
          %p236 = pneg %p96
        $region18: #{_lambda_.4} parent=11 // pred_check_branch
          %238 = sbr.rel (%p236) target = $region20
        $region19: #{_lambda_.4} parent=11 // pred_region
          _
        $region20: #{_lambda_.4} parent=11 // pred_fallthru
          _
        // Predicated region
        $region21: #{_lambda_.4} parent=11 // pred_check
          %p239 = pneg %p117
        $region22: #{_lambda_.4} parent=11 // pred_check_branch
          %241 = sbr.rel (%p239) target = $region24
        $region23: #{_lambda_.4} parent=11 // pred_region
          _
        $region24: #{_lambda_.4} parent=11 // pred_fallthru
          _
        // Predicated region
        $region25: #{_lambda_.4} parent=11 // pred_check
          %p242 = pneg %p138
        $region26: #{_lambda_.4} parent=11 // pred_check_branch
          %244 = sbr.rel (%p242) target = $region28
        $region27: #{_lambda_.4} parent=11 // pred_region
          _
        $region28: #{_lambda_.4} parent=11 // pred_fallthru
          _
      $region12: #{_lambda_.4} parent=5 // pred_fallthru
        _
      %p245 = scmp.lt.s32.totalorder %s14, 6
      // Predicated region
      $region29: #{_lambda_.4} parent=5 // pred_check
        %p246 = pneg %p245
      $region30: #{_lambda_.4} parent=5 // pred_check_branch
        %248 = sbr.rel (%p246) target = $region32
      $region31: #{_lambda_.4} parent=5 // pred_region
        // Predicated region
        $region33: #{_lambda_.4} parent=31 // pred_check
          %p249 = pneg %p48
        $region34: #{_lambda_.4} parent=31 // pred_check_branch
          %251 = sbr.rel (%p249) target = $region36
        $region35: #{_lambda_.4} parent=31 // pred_region
          %s252 = sand.u32 %s38, 1
          %s253 = sand.u32 %s38, 1
          %s254 = smul.addr %s253, 32
          %s255 = scalar_lea.vmem [#allocation2], %s254
          %s256 = smul.addr %s21, 12
          %s257 = sadd.s32 %s22, %s256
          %s258 = smul.addr %s257, 8
          %s259 = scalar_lea.vmem %s0, %s258
          // Predicated region
          $region37: #{_lambda_.4} parent=35 // pred_check
            _
          $region38: #{_lambda_.4} parent=35 // pred_check_branch
            %261 = sbr.rel (0) target = $region40
          $region39: #{_lambda_.4} parent=35 // pred_region
            // Predicated region
            $region41: #{_lambda_.4} parent=39 // pred_check
              _
            $region42: #{_lambda_.4} parent=39 // pred_check_branch
              %263 = sbr.rel (0) target = $region44
            $region43: #{_lambda_.4} parent=39 // pred_region
              // Predicated region
              $region56: #{_lambda_.4} parent=43 // pred_check
                _
              $region57: #{_lambda_.4} parent=43 // pred_check_branch
                %284 = sbr.rel (0) target = $region59
              $region58: #{_lambda_.4} parent=43 // pred_region
                loop: start=0, step=1, limit=1
                $region60: #{_lambda_.4} parent=58 // loop_pre_header
                  _
                $region61: #{_lambda_.4} parent=58 // loop_header
                  %s286 = sphi 0, %s290
                  %p287 = scmp.ge.s32.totalorder %s286, 1
                  %s291 = sphi %s259, %s259
                  %s292 = sphi %s255, %s255
                $region62: #{_lambda_.4} parent=58 // loop_header_branch
                  %289 = sbr.rel (%p287) target = $region66
                $region63: #{_lambda_.4} parent=58 // loop_body
                  %v293 = vld [vmem:[%s291] sm:$0xff]
                  %294 = vst [vmem:[%s292] sm:$0xff] %v293
                  %v295 = vld [vmem:[%s291 + $0x18] sm:$0xff]
                  %296 = vst [vmem:[%s292 + $0x8] sm:$0xff] %v295
                  %v297 = vld [vmem:[%s291 + $0x30] sm:$0xff]
                  %298 = vst [vmem:[%s292 + $0x10] sm:$0xff] %v297
                  %v299 = vld [vmem:[%s291 + $0x48] sm:$0xff]
                  %300 = vst [vmem:[%s292 + $0x18] sm:$0xff] %v299
                $region64: #{_lambda_.4} parent=58 // loop_footer
                  %s290 = sadd.s32 1, %s286
                $region65: #{_lambda_.4} parent=58 // loop_footer_branch
                  %285 = sbr.rel target = $region61
                $region66: #{_lambda_.4} parent=58 // loop_exit
                  _
              $region59: #{_lambda_.4} parent=43 // pred_fallthru
                _
              // Predicated region
              $region67: #{_lambda_.4} parent=43 // pred_check
                _
              $region68: #{_lambda_.4} parent=43 // pred_check_branch
                %302 = sbr.rel target = $region70
              $region69: #{_lambda_.4} parent=43 // pred_region
                _
              $region70: #{_lambda_.4} parent=43 // pred_fallthru
                _
            $region44: #{_lambda_.4} parent=39 // pred_fallthru
              _
            // Predicated region
            $region45: #{_lambda_.4} parent=39 // pred_check
              _
            $region46: #{_lambda_.4} parent=39 // pred_check_branch
              %265 = sbr.rel target = $region48
            $region47: #{_lambda_.4} parent=39 // pred_region
              loop: start=0, step=1, limit=1
              $region49: #{_lambda_.4} parent=47 // loop_pre_header
                _
              $region50: #{_lambda_.4} parent=47 // loop_header
                %s268 = sphi 0, %s272
                %p269 = scmp.ge.s32.totalorder %s268, 1
                %s273 = sphi %s259, %s259
                %s274 = sphi %s255, %s255
              $region51: #{_lambda_.4} parent=47 // loop_header_branch
                %271 = sbr.rel (%p269) target = $region55
              $region52: #{_lambda_.4} parent=47 // loop_body
                %v275 = vld [vmem:[%s273] sm:$0xff]
                %276 = vst [vmem:[%s274] sm:$0xff] %v275
                %v277 = vld [vmem:[%s273 + $0x18] sm:$0xff]
                %278 = vst [vmem:[%s274 + $0x8] sm:$0xff] %v277
                %v279 = vld [vmem:[%s273 + $0x30] sm:$0xff]
                %280 = vst [vmem:[%s274 + $0x10] sm:$0xff] %v279
                %v281 = vld [vmem:[%s273 + $0x48] sm:$0xff]
                %282 = vst [vmem:[%s274 + $0x18] sm:$0xff] %v281
              $region53: #{_lambda_.4} parent=47 // loop_footer
                %s272 = sadd.s32 1, %s268
              $region54: #{_lambda_.4} parent=47 // loop_footer_branch
                %267 = sbr.rel target = $region50
              $region55: #{_lambda_.4} parent=47 // loop_exit
                _
            $region48: #{_lambda_.4} parent=39 // pred_fallthru
              _
          $region40: #{_lambda_.4} parent=35 // pred_fallthru
            _
          %303 = vnop
        $region36: #{_lambda_.4} parent=31 // pred_fallthru
          _
      $region32: #{_lambda_.4} parent=5 // pred_fallthru
        _
      %p304 = scmp.le.s32.totalorder 1, %s14
      %p305 = scmp.lt.s32.totalorder %s14, 7
      %p306 = pnand %p304, %p305
      %p307 = pneg %p306
      // Predicated region
      $region71: #{_lambda_.4} parent=5 // pred_check
        _
      $region72: #{_lambda_.4} parent=5 // pred_check_branch
        %309 = sbr.rel (%p306) target = $region74
      $region73: #{_lambda_.4} parent=5 // pred_region
        %s310 = ssub.s32 %s14, 1
        %s311 = sand.u32 %s41, 1
        %s312 = sand.u32 %s41, 1
        %s313 = smul.addr %s312, 32
        %s314 = scalar_lea.vmem [#allocation2], %s313
        // Predicated region
        $region75: #{_lambda_.4} parent=73 // pred_check
          %p315 = pneg %p54
        $region76: #{_lambda_.4} parent=73 // pred_check_branch
          %317 = sbr.rel (%p315) target = $region78
        $region77: #{_lambda_.4} parent=73 // pred_region
          _
        $region78: #{_lambda_.4} parent=73 // pred_fallthru
          _
        %s318 = sand.u32 %s41, 1
        %s319 = sand.u32 %s41, 1
        %s320 = smul.addr %s319, 32
        %s321 = scalar_lea.vmem [#allocation2], %s320
        %p322 = pneg %p54
        %p323 = pneg %p51
        %p324 = pneg %p75
        %p325 = pneg %p72
        %p326 = pneg %p96
        %p327 = pneg %p93
        %p328 = pneg %p117
        %p329 = pneg %p114
        %p330 = pneg %p138
        %p331 = pneg %p135
        %p332 = pneg %p166
        %p333 = pneg %p163
        %s334 = sand.u32 %s153, 1
        %s335 = sand.u32 %s153, 1
        %s336 = smul.addr %s335, 32
        %s337 = scalar_lea.vmem [#allocation3], %s336
        %p338 = pneg %p192
        %p339 = pneg %p189
        %p340 = scmp.lt.s32.totalorder %s23, 1
        %s341 = scalar_select %p340, %s23, 1
        %s342 = smul.addr %s341, 4
        %s343 = smul.addr %s342, 8
        %s344 = scalar_lea.vmem %s6, %s343
        %p345 = pneg %p218
        %p346 = pneg %p215
        %p347 = scmp.lt.s32.totalorder %s23, 1
        %s348 = scalar_select %p347, %s23, 1
        %s349 = smul.addr %s348, 4
        %s350 = smul.addr %s349, 8
        %s351 = scalar_lea.vmem %s7, %s350
        %p352 = scmp.lt.s32.totalorder %s23, 1
        %s353 = scalar_select %p352, %s23, 1
        %s354 = smul.addr %s353, 4
        %s355 = smul.addr %s354, 8
        %s356 = scalar_lea.vmem %s6, %s355
        %p357 = scmp.lt.s32.totalorder %s23, 1
        %s358 = scalar_select %p357, %s23, 1
        %s359 = smul.addr %s358, 4
        %s360 = smul.addr %s359, 8
        %s361 = scalar_lea.vmem %s7, %s360
        %p362 = scmp.eq.s32.totalorder %s24, 0
        // Predicated region
        $region79: #{_lambda_.4} parent=73 // pred_check
          %p363 = pneg %p362
        $region80: #{_lambda_.4} parent=73 // pred_check_branch
          %365 = sbr.rel (%p363) target = $region82
        $region81: #{_lambda_.4} parent=73 // pred_region
          %366 = vst [vmem:[%s356] sm:$0xff] 0.0
          %367 = vst [vmem:[%s356 + $0x8] sm:$0xff] 0.0
          %368 = vst [vmem:[%s356 + $0x10] sm:$0xff] 0.0
          %369 = vst [vmem:[%s356 + $0x18] sm:$0xff] 0.0
          %370 = vst [vmem:[%s361] sm:$0xff] 0.0
          %371 = vst [vmem:[%s361 + $0x8] sm:$0xff] 0.0
          %372 = vst [vmem:[%s361 + $0x10] sm:$0xff] 0.0
          %373 = vst [vmem:[%s361 + $0x18] sm:$0xff] 0.0
        $region82: #{_lambda_.4} parent=73 // pred_fallthru
          _
        %v374 = vld [vmem:[%s1] sm:$0xff]
        %v375 = vld [vmem:[%s1 + $0x8] sm:$0xff]
        %v376 = vld [vmem:[%s1 + $0x10] sm:$0xff]
        %v377 = vld [vmem:[%s1 + $0x18] sm:$0xff]
        %v378 = vld [vmem:[%s1 + $0x20] sm:$0xff]
        %v379 = vld [vmem:[%s1 + $0x28] sm:$0xff]
        %v380 = vld [vmem:[%s1 + $0x30] sm:$0xff]
        %v381 = vld [vmem:[%s1 + $0x38] sm:$0xff]
        %v382 = vld [vmem:[%s314] sm:$0xff]
        %v383 = vld [vmem:[%s314 + $0x8] sm:$0xff]
        %v384 = vld [vmem:[%s314 + $0x10] sm:$0xff]
        %v385 = vld [vmem:[%s314 + $0x18] sm:$0xff]
        %v386 = vld [vmem:[%s2] sm:$0xff]
        %v387 = vld [vmem:[%s2 + $0x8] sm:$0xff]
        %v388 = vld [vmem:[%s2 + $0x10] sm:$0xff]
        %v389 = vld [vmem:[%s2 + $0x18] sm:$0xff]
        %v390 = vld [vmem:[%s2 + $0x20] sm:$0xff]
        %v391 = vld [vmem:[%s2 + $0x28] sm:$0xff]
        %v392 = vld [vmem:[%s2 + $0x30] sm:$0xff]
        %v393 = vld [vmem:[%s2 + $0x38] sm:$0xff]
        %395 = vset.pattern.permute.xlu0 0
        %396 = vperm.xlu0 %395, %v386
        %v397 = vpop.permute.xlu0 %396
        %400 = vset.pattern.permute.xlu0 0
        %401 = vperm.xlu0 %400, %v387
        %v402 = vpop.permute.xlu0 %401
        %405 = vset.pattern.permute.xlu0 0
        %406 = vperm.xlu0 %405, %v388
        %v407 = vpop.permute.xlu0 %406
        %410 = vset.pattern.permute.xlu0 0
        %411 = vperm.xlu0 %410, %v389
        %v412 = vpop.permute.xlu0 %411
        %415 = vset.pattern.permute.xlu0 0
        %416 = vperm.xlu0 %415, %v390
        %v417 = vpop.permute.xlu0 %416
        %420 = vset.pattern.permute.xlu0 0
        %421 = vperm.xlu0 %420, %v391
        %v422 = vpop.permute.xlu0 %421
        %425 = vset.pattern.permute.xlu0 0
        %426 = vperm.xlu0 %425, %v392
        %v427 = vpop.permute.xlu0 %426
        %430 = vset.pattern.permute.xlu0 0
        %431 = vperm.xlu0 %430, %v393
        %v432 = vpop.permute.xlu0 %431
        %vm434 = vcmask 261120
        %v436 = vsel %vm434, %v374, 0
        %v439 = vsel %vm434, %v375, 0
        %v442 = vsel %vm434, %v376, 0
        %v445 = vsel %vm434, %v377, 0
        %v448 = vsel %vm434, %v378, 0
        %v451 = vsel %vm434, %v379, 0
        %v454 = vsel %vm434, %v380, 0
        %v457 = vsel %vm434, %v381, 0
        %459 = vmatprep.subr.mxu0 0.0
        %460 = vmatpush1.msra.mxu0 %v382
        %461 = vmatprep.subr.mxu0 0.0
        %462 = vmatpush1.msra.mxu0 %v383
        %463 = vmatprep.subr.mxu0 0.0
        %464 = vmatpush1.msra.mxu0 %v384
        %465 = vmatprep.subr.mxu0 0.0
        %466 = vmatpush1.msra.mxu0 %v385
        %467 = vmatprep.subr.mxu0 0.0
        %468 = vmatpush1.msra.mxu0 0.0
        %469 = vmatprep.subr.mxu0 0.0
        %470 = vmatpush1.msra.mxu0 0.0
        %471 = vmatprep.subr.mxu0 0.0
        %472 = vmatpush1.msra.mxu0 0.0
        %473 = vmatprep.subr.mxu0 0.0
        %474 = vmatpush1.msra.mxu0 0.0
        %475 = vmatprep.subr.mxu0 0.0
        %476 = vmatpush1.msra.mxu0 0.0
        %477 = vmatprep.subr.mxu0 0.0
        %478 = vmatpush1.msra.mxu0 0.0
        %479 = vmatprep.subr.mxu0 0.0
        %480 = vmatpush1.msra.mxu0 0.0
        %481 = vmatprep.subr.mxu0 0.0
        %482 = vmatpush1.msra.mxu0 0.0
        %483 = vmatprep.subr.mxu0 0.0
        %484 = vmatpush1.msra.mxu0 0.0
        %485 = vmatprep.subr.mxu0 0.0
        %486 = vmatpush1.msra.mxu0 0.0
        %487 = vmatprep.subr.mxu0 0.0
        %488 = vmatpush1.msra.mxu0 0.0
        %489 = vmatprep.subr.mxu0 0.0
        %490 = vmatpush1.msra.mxu0 0.0
        %491 = vmatprep.subr.mxu0 0.0
        %492 = vmatpush1.msra.mxu0 0.0
        %493 = vmatprep.subr.mxu0 0.0
        %494 = vmatpush1.msra.mxu0 0.0
        %495 = vmatprep.subr.mxu0 0.0
        %496 = vmatpush1.msra.mxu0 0.0
        %497 = vmatprep.subr.mxu0 0.0
        %498 = vmatpush1.msra.mxu0 0.0
        %499 = vmatprep.subr.mxu0 0.0
        %500 = vmatpush1.msra.mxu0 0.0
        %501 = vmatprep.subr.mxu0 0.0
        %502 = vmatpush1.msra.mxu0 0.0
        %503 = vmatprep.subr.mxu0 0.0
        %504 = vmatpush1.msra.mxu0 0.0
        %505 = vmatprep.subr.mxu0 0.0
        %506 = vmatpush1.msra.mxu0 0.0
        %507 = vmatprep.subr.mxu0 0.0
        %508 = vmatpush1.msra.mxu0 0.0
        %509 = vmatprep.subr.mxu0 0.0
        %510 = vmatpush1.msra.mxu0 0.0
        %511 = vmatprep.subr.mxu0 0.0
        %512 = vmatpush1.msra.mxu0 0.0
        %513 = vmatprep.subr.mxu0 0.0
        %514 = vmatpush1.msra.mxu0 0.0
        %515 = vmatprep.subr.mxu0 0.0
        %516 = vmatpush1.msra.mxu0 0.0
        %517 = vmatprep.subr.mxu0 0.0
        %518 = vmatpush1.msra.mxu0 0.0
        %519 = vmatprep.subr.mxu0 0.0
        %520 = vmatpush1.msra.mxu0 0.0
        %521 = vmatprep.subr.mxu0 0.0
        %522 = vmatpush1.msra.mxu0 0.0
        %523 = vmatprep.mubr.f32.mxu0 0.0
        %524 = vmatmul.mubr.f32.gmra.mrb[0].mxu0 %v436
        %v525 = vpop.f32.mrb[0].mxu0
        %v526 = vadd.f32 %v397, %v525
        %v527 = vpop.f32.mrb[0].mxu0
        %528 = vmatprep.mubr.f32.mxu0 0.0
        %529 = vmatmul.mubr.f32.gmra.mrb[0].mxu0 %v439
        %v530 = vpop.f32.mrb[0].mxu0
        %v531 = vadd.f32 %v402, %v530
        %v532 = vpop.f32.mrb[0].mxu0
        %533 = vmatprep.mubr.f32.mxu0 0.0
        %534 = vmatmul.mubr.f32.gmra.mrb[0].mxu0 %v442
        %v535 = vpop.f32.mrb[0].mxu0
        %v536 = vadd.f32 %v407, %v535
        %v537 = vpop.f32.mrb[0].mxu0
        %538 = vmatprep.mubr.f32.mxu0 0.0
        %539 = vmatmul.mubr.f32.gmra.mrb[0].mxu0 %v445
        %v540 = vpop.f32.mrb[0].mxu0
        %v541 = vadd.f32 %v412, %v540
        %v542 = vpop.f32.mrb[0].mxu0
        %543 = vmatprep.mubr.f32.mxu0 0.0
        %544 = vmatmul.mubr.f32.gmra.mrb[0].mxu0 %v448
        %v545 = vpop.f32.mrb[0].mxu0
        %v546 = vadd.f32 %v417, %v545
        %v547 = vpop.f32.mrb[0].mxu0
        %548 = vmatprep.mubr.f32.mxu0 0.0
        %549 = vmatmul.mubr.f32.gmra.mrb[0].mxu0 %v451
        %v550 = vpop.f32.mrb[0].mxu0
        %v551 = vadd.f32 %v422, %v550
        %v552 = vpop.f32.mrb[0].mxu0
        %553 = vmatprep.mubr.f32.mxu0 0.0
        %554 = vmatmul.mubr.f32.gmra.mrb[0].mxu0 %v454
        %v555 = vpop.f32.mrb[0].mxu0
        %v556 = vadd.f32 %v427, %v555
        %v557 = vpop.f32.mrb[0].mxu0
        %558 = vmatprep.mubr.f32.mxu0 0.0
        %559 = vmatmul.mubr.f32.gmra.mrb[0].mxu0 %v457
        %v560 = vpop.f32.mrb[0].mxu0
        %v561 = vadd.f32 %v432, %v560
        %v562 = vpop.f32.mrb[0].mxu0
        %563 = vdwg.mxu0
        %v564 = vmax.f32 %v526, 0.0
        %v565 = vmax.f32 %v531, 0.0
        %v566 = vmax.f32 %v536, 0.0
        %v567 = vmax.f32 %v541, 0.0
        %v568 = vmax.f32 %v546, 0.0
        %v569 = vmax.f32 %v551, 0.0
        %v570 = vmax.f32 %v556, 0.0
        %v571 = vmax.f32 %v561, 0.0
        %v572 = vld [vmem:[%s3] sm:$0xff]
        %v573 = vld [vmem:[%s3 + $0x8] sm:$0xff]
        %v574 = vld [vmem:[%s3 + $0x10] sm:$0xff]
        %v575 = vld [vmem:[%s3 + $0x18] sm:$0xff]
        %v576 = vld [vmem:[%s4] sm:$0xff]
        %v577 = vld [vmem:[%s4 + $0x8] sm:$0xff]
        %v578 = vld [vmem:[%s4 + $0x10] sm:$0xff]
        %v579 = vld [vmem:[%s4 + $0x18] sm:$0xff]
        %581 = vset.pattern.permute.xlu0 0
        %582 = vperm.xlu0 %581, %v576
        %v583 = vpop.permute.xlu0 %582
        %586 = vset.pattern.permute.xlu0 0
        %587 = vperm.xlu0 %586, %v577
        %v588 = vpop.permute.xlu0 %587
        %591 = vset.pattern.permute.xlu0 0
        %592 = vperm.xlu0 %591, %v578
        %v593 = vpop.permute.xlu0 %592
        %596 = vset.pattern.permute.xlu0 0
        %597 = vperm.xlu0 %596, %v579
        %v598 = vpop.permute.xlu0 %597
        %vm600 = vcmask 523264
        %v602 = vsel %vm600, %v572, 0
        %v605 = vsel %vm600, %v573, 0
        %v608 = vsel %vm600, %v574, 0
        %v611 = vsel %vm600, %v575, 0
        %613 = vmatprep.subr.mxu0 0.0
        %614 = vmatpush1.msra.mxu0 %v564
        %615 = vmatprep.subr.mxu0 0.0
        %616 = vmatpush1.msra.mxu0 %v565
        %617 = vmatprep.subr.mxu0 0.0
        %618 = vmatpush1.msra.mxu0 %v566
        %619 = vmatprep.subr.mxu0 0.0
        %620 = vmatpush1.msra.mxu0 %v567
        %621 = vmatprep.subr.mxu0 0.0
        %622 = vmatpush1.msra.mxu0 %v568
        %623 = vmatprep.subr.mxu0 0.0
        %624 = vmatpush1.msra.mxu0 %v569
        %625 = vmatprep.subr.mxu0 0.0
        %626 = vmatpush1.msra.mxu0 %v570
        %627 = vmatprep.subr.mxu0 0.0
        %628 = vmatpush1.msra.mxu0 %v571
        %629 = vmatprep.subr.mxu0 0.0
        %630 = vmatpush1.msra.mxu0 0.0
        %631 = vmatprep.subr.mxu0 0.0
        %632 = vmatpush1.msra.mxu0 0.0
        %633 = vmatprep.subr.mxu0 0.0
        %634 = vmatpush1.msra.mxu0 0.0
        %635 = vmatprep.subr.mxu0 0.0
        %636 = vmatpush1.msra.mxu0 0.0
        %637 = vmatprep.subr.mxu0 0.0
        %638 = vmatpush1.msra.mxu0 0.0
        %639 = vmatprep.subr.mxu0 0.0
        %640 = vmatpush1.msra.mxu0 0.0
        %641 = vmatprep.subr.mxu0 0.0
        %642 = vmatpush1.msra.mxu0 0.0
        %643 = vmatprep.subr.mxu0 0.0
        %644 = vmatpush1.msra.mxu0 0.0
        %645 = vmatprep.subr.mxu0 0.0
        %646 = vmatpush1.msra.mxu0 0.0
        %647 = vmatprep.subr.mxu0 0.0
        %648 = vmatpush1.msra.mxu0 0.0
        %649 = vmatprep.subr.mxu0 0.0
        %650 = vmatpush1.msra.mxu0 0.0
        %651 = vmatprep.subr.mxu0 0.0
        %652 = vmatpush1.msra.mxu0 0.0
        %653 = vmatprep.subr.mxu0 0.0
        %654 = vmatpush1.msra.mxu0 0.0
        %655 = vmatprep.subr.mxu0 0.0
        %656 = vmatpush1.msra.mxu0 0.0
        %657 = vmatprep.subr.mxu0 0.0
        %658 = vmatpush1.msra.mxu0 0.0
        %659 = vmatprep.subr.mxu0 0.0
        %660 = vmatpush1.msra.mxu0 0.0
        %661 = vmatprep.subr.mxu0 0.0
        %662 = vmatpush1.msra.mxu0 0.0
        %663 = vmatprep.subr.mxu0 0.0
        %664 = vmatpush1.msra.mxu0 0.0
        %665 = vmatprep.subr.mxu0 0.0
        %666 = vmatpush1.msra.mxu0 0.0
        %667 = vmatprep.subr.mxu0 0.0
        %668 = vmatpush1.msra.mxu0 0.0
        %669 = vmatprep.subr.mxu0 0.0
        %670 = vmatpush1.msra.mxu0 0.0
        %671 = vmatprep.subr.mxu0 0.0
        %672 = vmatpush1.msra.mxu0 0.0
        %673 = vmatprep.subr.mxu0 0.0
        %674 = vmatpush1.msra.mxu0 0.0
        %675 = vmatprep.subr.mxu0 0.0
        %676 = vmatpush1.msra.mxu0 0.0
        %677 = vmatprep.mubr.f32.mxu0 0.0
        %678 = vmatmul.mubr.f32.gmra.mrb[0].mxu0 %v602
        %v679 = vpop.f32.mrb[0].mxu0
        %v680 = vadd.f32 %v583, %v679
        %v681 = vpop.f32.mrb[0].mxu0
        %682 = vmatprep.mubr.f32.mxu0 0.0
        %683 = vmatmul.mubr.f32.gmra.mrb[0].mxu0 %v605
        %v684 = vpop.f32.mrb[0].mxu0
        %v685 = vadd.f32 %v588, %v684
        %v686 = vpop.f32.mrb[0].mxu0
        %687 = vmatprep.mubr.f32.mxu0 0.0
        %688 = vmatmul.mubr.f32.gmra.mrb[0].mxu0 %v608
        %v689 = vpop.f32.mrb[0].mxu0
        %v690 = vadd.f32 %v593, %v689
        %v691 = vpop.f32.mrb[0].mxu0
        %692 = vmatprep.mubr.f32.mxu0 0.0
        %693 = vmatmul.mubr.f32.gmra.mrb[0].mxu0 %v611
        %v694 = vpop.f32.mrb[0].mxu0
        %v695 = vadd.f32 %v598, %v694
        %v696 = vpop.f32.mrb[0].mxu0
        %697 = vdwg.mxu0
        %698 = vst [vmem:[%s337] sm:$0xff] %v680
        %699 = vst [vmem:[%s337 + $0x8] sm:$0xff] %v685
        %700 = vst [vmem:[%s337 + $0x10] sm:$0xff] %v690
        %701 = vst [vmem:[%s337 + $0x18] sm:$0xff] %v695
        %v702 = vld [vmem:[%s356] sm:$0xff]
        %v703 = vld [vmem:[%s356 + $0x8] sm:$0xff]
        %v704 = vld [vmem:[%s356 + $0x10] sm:$0xff]
        %v705 = vld [vmem:[%s356 + $0x18] sm:$0xff]
        %v706 = vld [vmem:[%s361] sm:$0xff]
        %v707 = vld [vmem:[%s361 + $0x8] sm:$0xff]
        %v708 = vld [vmem:[%s361 + $0x10] sm:$0xff]
        %v709 = vld [vmem:[%s361 + $0x18] sm:$0xff]
        %v710 = vadd.f32 %v702, %v680
        %v711 = vadd.f32 %v703, %v685
        %v712 = vadd.f32 %v704, %v690
        %v713 = vadd.f32 %v705, %v695
        %v714 = vmul.f32 %v680, %v680
        %v715 = vmul.f32 %v685, %v685
        %v716 = vmul.f32 %v690, %v690
        %v717 = vmul.f32 %v695, %v695
        %v718 = vadd.f32 %v706, %v714
        %v719 = vadd.f32 %v707, %v715
        %v720 = vadd.f32 %v708, %v716
        %v721 = vadd.f32 %v709, %v717
        %722 = vst [vmem:[%s356] sm:$0xff] %v710
        %723 = vst [vmem:[%s356 + $0x8] sm:$0xff] %v711
        %724 = vst [vmem:[%s356 + $0x10] sm:$0xff] %v712
        %725 = vst [vmem:[%s356 + $0x18] sm:$0xff] %v713
        %726 = vst [vmem:[%s361] sm:$0xff] %v718
        %727 = vst [vmem:[%s361 + $0x8] sm:$0xff] %v719
        %728 = vst [vmem:[%s361 + $0x10] sm:$0xff] %v720
        %729 = vst [vmem:[%s361 + $0x18] sm:$0xff] %v721
        %s730 = sand.u32 %s153, 1
        %s731 = sand.u32 %s153, 1
        %s732 = smul.addr %s731, 32
        %s733 = scalar_lea.vmem [#allocation3], %s732
        %p734 = scmp.lt.s32.totalorder %s23, 1
        %s735 = scalar_select %p734, %s23, 1
        %s736 = smul.addr %s735, 4
        %s737 = smul.addr %s736, 8
        %s738 = scalar_lea.vmem %s6, %s737
        %p739 = scmp.lt.s32.totalorder %s23, 1
        %s740 = scalar_select %p739, %s23, 1
        %s741 = smul.addr %s740, 4
        %s742 = smul.addr %s741, 8
        %s743 = scalar_lea.vmem %s7, %s742
        // Predicated region
        $region83: #{_lambda_.4} parent=73 // pred_check
          %p744 = pneg %p163
        $region84: #{_lambda_.4} parent=73 // pred_check_branch
          %746 = sbr.rel (%p744) target = $region86
        $region85: #{_lambda_.4} parent=73 // pred_region
          %s747 = smul.addr %s23, 12
          %s748 = sadd.s32 %s24, %s747
          %s749 = smul.addr %s748, 8
          %s750 = scalar_lea.vmem %s5, %s749
          // Predicated region
          $region87: #{_lambda_.4} parent=85 // pred_check
            _
          $region88: #{_lambda_.4} parent=85 // pred_check_branch
            %752 = sbr.rel (0) target = $region90
          $region89: #{_lambda_.4} parent=85 // pred_region
            // Predicated region
            $region91: #{_lambda_.4} parent=89 // pred_check
              _
            $region92: #{_lambda_.4} parent=89 // pred_check_branch
              %754 = sbr.rel (0) target = $region94
            $region93: #{_lambda_.4} parent=89 // pred_region
              // Predicated region
              $region106: #{_lambda_.4} parent=93 // pred_check
                _
              $region107: #{_lambda_.4} parent=93 // pred_check_branch
                %775 = sbr.rel (0) target = $region109
              $region108: #{_lambda_.4} parent=93 // pred_region
                loop: start=0, step=1, limit=1
                $region110: #{_lambda_.4} parent=108 // loop_pre_header
                  _
                $region111: #{_lambda_.4} parent=108 // loop_header
                  %s777 = sphi 0, %s781
                  %p778 = scmp.ge.s32.totalorder %s777, 1
                  %s782 = sphi %s733, %s733
                  %s783 = sphi %s750, %s750
                $region112: #{_lambda_.4} parent=108 // loop_header_branch
                  %780 = sbr.rel (%p778) target = $region116
                $region113: #{_lambda_.4} parent=108 // loop_body
                  %v784 = vld [vmem:[%s782] sm:$0xff]
                  %785 = vst [vmem:[%s783] sm:$0xff] %v784
                  %v786 = vld [vmem:[%s782 + $0x8] sm:$0xff]
                  %787 = vst [vmem:[%s783 + $0x18] sm:$0xff] %v786
                  %v788 = vld [vmem:[%s782 + $0x10] sm:$0xff]
                  %789 = vst [vmem:[%s783 + $0x30] sm:$0xff] %v788
                  %v790 = vld [vmem:[%s782 + $0x18] sm:$0xff]
                  %791 = vst [vmem:[%s783 + $0x48] sm:$0xff] %v790
                $region114: #{_lambda_.4} parent=108 // loop_footer
                  %s781 = sadd.s32 1, %s777
                $region115: #{_lambda_.4} parent=108 // loop_footer_branch
                  %776 = sbr.rel target = $region111
                $region116: #{_lambda_.4} parent=108 // loop_exit
                  _
              $region109: #{_lambda_.4} parent=93 // pred_fallthru
                _
              // Predicated region
              $region117: #{_lambda_.4} parent=93 // pred_check
                _
              $region118: #{_lambda_.4} parent=93 // pred_check_branch
                %793 = sbr.rel target = $region120
              $region119: #{_lambda_.4} parent=93 // pred_region
                _
              $region120: #{_lambda_.4} parent=93 // pred_fallthru
                _
            $region94: #{_lambda_.4} parent=89 // pred_fallthru
              _
            // Predicated region
            $region95: #{_lambda_.4} parent=89 // pred_check
              _
            $region96: #{_lambda_.4} parent=89 // pred_check_branch
              %756 = sbr.rel target = $region98
            $region97: #{_lambda_.4} parent=89 // pred_region
              loop: start=0, step=1, limit=1
              $region99: #{_lambda_.4} parent=97 // loop_pre_header
                _
              $region100: #{_lambda_.4} parent=97 // loop_header
                %s759 = sphi 0, %s763
                %p760 = scmp.ge.s32.totalorder %s759, 1
                %s764 = sphi %s733, %s733
                %s765 = sphi %s750, %s750
              $region101: #{_lambda_.4} parent=97 // loop_header_branch
                %762 = sbr.rel (%p760) target = $region105
              $region102: #{_lambda_.4} parent=97 // loop_body
                %v766 = vld [vmem:[%s764] sm:$0xff]
                %767 = vst [vmem:[%s765] sm:$0xff] %v766
                %v768 = vld [vmem:[%s764 + $0x8] sm:$0xff]
                %769 = vst [vmem:[%s765 + $0x18] sm:$0xff] %v768
                %v770 = vld [vmem:[%s764 + $0x10] sm:$0xff]
                %771 = vst [vmem:[%s765 + $0x30] sm:$0xff] %v770
                %v772 = vld [vmem:[%s764 + $0x18] sm:$0xff]
                %773 = vst [vmem:[%s765 + $0x48] sm:$0xff] %v772
              $region103: #{_lambda_.4} parent=97 // loop_footer
                %s763 = sadd.s32 1, %s759
              $region104: #{_lambda_.4} parent=97 // loop_footer_branch
                %758 = sbr.rel target = $region100
              $region105: #{_lambda_.4} parent=97 // loop_exit
                _
            $region98: #{_lambda_.4} parent=89 // pred_fallthru
              _
          $region90: #{_lambda_.4} parent=85 // pred_fallthru
            _
          %794 = vnop
        $region86: #{_lambda_.4} parent=73 // pred_fallthru
          _
        // Predicated region
        $region121: #{_lambda_.4} parent=73 // pred_check
          %p795 = pneg %p189
        $region122: #{_lambda_.4} parent=73 // pred_check_branch
          %797 = sbr.rel (%p795) target = $region124
        $region123: #{_lambda_.4} parent=73 // pred_region
          _
        $region124: #{_lambda_.4} parent=73 // pred_fallthru
          _
        // Predicated region
        $region125: #{_lambda_.4} parent=73 // pred_check
          %p798 = pneg %p215
        $region126: #{_lambda_.4} parent=73 // pred_check_branch
          %800 = sbr.rel (%p798) target = $region128
        $region127: #{_lambda_.4} parent=73 // pred_region
          _
        $region128: #{_lambda_.4} parent=73 // pred_fallthru
          _
      $region74: #{_lambda_.4} parent=5 // pred_fallthru
        _
      %p801 = scmp.le.s32.totalorder 2, %s14
      // Predicated region
      $region129: #{_lambda_.4} parent=5 // pred_check
        %p802 = pneg %p801
      $region130: #{_lambda_.4} parent=5 // pred_check_branch
        %804 = sbr.rel (%p802) target = $region132
      $region131: #{_lambda_.4} parent=5 // pred_region
        %s805 = ssub.s32 %s14, 2
        // Predicated region
        $region133: #{_lambda_.4} parent=131 // pred_check
          %p806 = pneg %p169
        $region134: #{_lambda_.4} parent=131 // pred_check_branch
          %808 = sbr.rel (%p806) target = $region136
        $region135: #{_lambda_.4} parent=131 // pred_region
          %s809 = sand.u32 %s154, 1
          %s810 = sand.u32 %s154, 1
          %s811 = smul.addr %s810, 32
          %s812 = scalar_lea.vmem [#allocation3], %s811
        $region136: #{_lambda_.4} parent=131 // pred_fallthru
          _
        // Predicated region
        $region137: #{_lambda_.4} parent=131 // pred_check
          %p813 = pneg %p195
        $region138: #{_lambda_.4} parent=131 // pred_check_branch
          %815 = sbr.rel (%p813) target = $region140
        $region139: #{_lambda_.4} parent=131 // pred_region
          %p816 = scmp.lt.s32.totalorder %s25, 1
          %s817 = scalar_select %p816, %s25, 1
          %s818 = smul.addr %s817, 4
          %s819 = smul.addr %s818, 8
          %s820 = scalar_lea.vmem %s6, %s819
        $region140: #{_lambda_.4} parent=131 // pred_fallthru
          _
        // Predicated region
        $region141: #{_lambda_.4} parent=131 // pred_check
          %p821 = pneg %p221
        $region142: #{_lambda_.4} parent=131 // pred_check_branch
          %823 = sbr.rel (%p821) target = $region144
        $region143: #{_lambda_.4} parent=131 // pred_region
          %p824 = scmp.lt.s32.totalorder %s25, 1
          %s825 = scalar_select %p824, %s25, 1
          %s826 = smul.addr %s825, 4
          %s827 = smul.addr %s826, 8
          %s828 = scalar_lea.vmem %s7, %s827
        $region144: #{_lambda_.4} parent=131 // pred_fallthru
          _
      $region132: #{_lambda_.4} parent=5 // pred_fallthru
        _
    $region6: #{_lambda_.4} parent=1 // loop_footer
      %s18 = sadd.s32 1, %s14
    $region7: #{_lambda_.4} parent=1 // loop_footer_branch
      %13 = sbr.rel target = $region3
    $region8: #{_lambda_.4} parent=1 // loop_exit
      _

</llo_original>
